<compile_context>
chip_gen: v5e
topology: v5e:2x2
jax: 0.10.0
libtpu: 0.0.40
codegen_flags: <defaults>
</compile_context>

<pallas_src>
import math

import jax
import jax.numpy as jnp
from jax.experimental import pallas as pl
from jax.experimental.pallas import tpu as pltpu


def _softmax_last(x):
    m = jnp.max(x, axis=-1, keepdims=True)
    e = jnp.exp(x - m)
    # NOTE: pl.reciprocal(sum, approx=True) would push this divide to the EUP
    # slot; kept exact to stay within tight f32 tolerance of the reference.
    return e / jnp.sum(e, axis=-1, keepdims=True)


def make_kernel(tb, n1, n2, d1, d2, h, dk):
    def kernel(d1_ref, d2_ref, wq1_ref, wq2_ref,
               w1a_ref, w1b_ref, b1_ref,
               w2a_ref, w2b_ref, b2_ref,
               out1_ref, out2_ref):
        x1 = d1_ref[...]                        # [TB, N1, D1]
        x2 = d2_ref[...]                        # [TB, N2, D2]
        X1 = x1.reshape(tb * n1, d1)            # merge leading dims (layout-trivial)
        X2 = x2.reshape(tb * n2, d2)

        # Q/K projections. wq1 is pre-transposed AND pre-scaled by 1/sqrt(dk)
        # in the wrapper, so no in-kernel transpose and no per-head scaling.
        q1 = jnp.dot(X1, wq1_ref[...], preferred_element_type=jnp.float32)
        q2 = jnp.dot(X2, wq2_ref[...], preferred_element_type=jnp.float32)
        q1 = q1.reshape(tb, n1, h * dk)         # [TB, N1, dim]
        q2 = q2.reshape(tb, n2, h * dk)         # [TB, N2, dim]

        # Per-head softmax; the sum over heads is hoisted out of the
        # probability @ value matmul (values are head-independent), so only a
        # single PV matmul per side is needed instead of h.
        # TODO(synk): for production dims, batch the per-head score matmuls
        # (heads on a leading axis) or pad dk to the 128-lane granule to avoid
        # the sub-lane q slices below.
        p1_sum = jnp.zeros((tb, n2, n1), jnp.float32)
        p2_sum = jnp.zeros((tb, n1, n2), jnp.float32)
        for i in range(h):                      # h is small & static: unrolled
            q1_i = q1[:, :, i * dk:(i + 1) * dk]          # [TB, N1, dk]
            q2_i = q2[:, :, i * dk:(i + 1) * dk]          # [TB, N2, dk]
            s1 = jnp.einsum("bqd,bkd->bqk", q2_i, q1_i,
                            preferred_element_type=jnp.float32)   # [TB, N2, N1]
            p1_sum = p1_sum + _softmax_last(s1)
            s2 = jnp.einsum("bqd,bkd->bqk", q1_i, q2_i,
                            preferred_element_type=jnp.float32)   # [TB, N1, N2]
            p2_sum = p2_sum + _softmax_last(s2)

        inv_h = 1.0 / h
        weighted1 = jnp.einsum("bqk,bkd->bqd", p1_sum, x1,
                               preferred_element_type=jnp.float32) * inv_h  # [TB,N2,D1]
        weighted2 = jnp.einsum("bqk,bkd->bqd", p2_sum, x2,
                               preferred_element_type=jnp.float32) * inv_h  # [TB,N1,D2]
        W1f = weighted1.reshape(tb * n2, d1)
        W2f = weighted2.reshape(tb * n1, d2)

        # Gated fusion. Sigmoid/tanh weights are fused along their output dim
        # in the wrapper -> 2 matmuls per side (output width 2*D) instead of 4.
        z1 = (jnp.dot(X1, w1a_ref[...], preferred_element_type=jnp.float32)
              + jnp.dot(W2f, w1b_ref[...], preferred_element_type=jnp.float32)
              + b1_ref[...])                                     # [TB*N1, 2*D1]
        g1 = jax.nn.sigmoid(z1[:, :d1])
        t1 = jnp.tanh(z1[:, d1:])
        out1_ref[...] = (g1 * X1 + (1.0 - g1) * t1).reshape(tb, n1, d1).astype(out1_ref.dtype)

        z2 = (jnp.dot(X2, w2a_ref[...], preferred_element_type=jnp.float32)
              + jnp.dot(W1f, w2b_ref[...], preferred_element_type=jnp.float32)
              + b2_ref[...])                                     # [TB*N2, 2*D2]
        g2 = jax.nn.sigmoid(z2[:, :d2])
        t2 = jnp.tanh(z2[:, d2:])
        out2_ref[...] = (g2 * X2 + (1.0 - g2) * t2).reshape(tb, n2, d2).astype(out2_ref.dtype)

    return kernel


def _batch_tile(B):
    # Fold several batches per grid step (amortize ~0.35us per-step overhead),
    # but keep >=2 parallel grid steps when possible so both v7x TensorCores
    # get work (no-op on single-TC v5e/v6e).
    for tb in (8, 4, 2, 1):
        if tb <= B and B % tb == 0 and (B // tb) >= 2:
            return tb
    return B


def normal_sublayer1_pallas(data1, data2, params, num_attn, mask1=None, mask2=None):
    # mask1/mask2 are ignored: the reference qkv_attention never uses `mask`.
    B, N1, D1 = data1.shape
    _, N2, D2 = data2.shape
    dim = min(D1, D2)
    dk = dim // num_attn
    scale = 1.0 / math.sqrt(dk)

    # ---- one-time weight prep in XLA (outside the kernel) -------------------
    wq1_t = (params["wq1"] * scale).T          # [D1, dim], score scale folded in
    wq2_t = params["wq2"].T                    # [D2, dim]

    wre1, bre1 = params["wre1"], params["bre1"]    # act on cat([data1, weighted2])
    wl1, bl1 = params["wl1"], params["bl1"]
    wre2, bre2 = params["wre2"], params["bre2"]    # act on cat([data2, weighted1])
    wl2, bl2 = params["wl2"], params["bl2"]

    # Fuse (sigmoid | tanh) branches along the output dim and split the
    # concatenated input dim so no in-kernel concat is needed.
    w1a = jnp.concatenate([wre1[:, :D1], wl1[:, :D1]], axis=0).T   # [D1, 2*D1]
    w1b = jnp.concatenate([wre1[:, D1:], wl1[:, D1:]], axis=0).T   # [D2, 2*D1]
    b1 = jnp.concatenate([bre1, bl1]).reshape(1, 2 * D1)
    w2a = jnp.concatenate([wre2[:, :D2], wl2[:, :D2]], axis=0).T   # [D2, 2*D2]
    w2b = jnp.concatenate([wre2[:, D2:], wl2[:, D2:]], axis=0).T   # [D1, 2*D2]
    b2 = jnp.concatenate([bre2, bl2]).reshape(1, 2 * D2)

    TB = _batch_tile(B)
    kernel = make_kernel(TB, N1, N2, D1, D2, num_attn, dk)

    def const_spec(arr):
        nd = arr.ndim
        return pl.BlockSpec(arr.shape, lambda b, _n=nd: (0,) * _n)

    in_specs = [
        pl.BlockSpec((TB, N1, D1), lambda b: (b, 0, 0)),   # data1
        pl.BlockSpec((TB, N2, D2), lambda b: (b, 0, 0)),   # data2
        const_spec(wq1_t), const_spec(wq2_t),
        const_spec(w1a), const_spec(w1b), const_spec(b1),
        const_spec(w2a), const_spec(w2b), const_spec(b2),
    ]
    out_specs = [
        pl.BlockSpec((TB, N1, D1), lambda b: (b, 0, 0)),
        pl.BlockSpec((TB, N2, D2), lambda b: (b, 0, 0)),
    ]

    # TODO(synk): for production-size dims on v7x (64 MiB VMEM), single-buffer
    # the constant weight operands (pipeline_mode=pl.Buffered(1)) and set
    # vmem_limit_bytes in CompilerParams; unnecessary at these small shapes.
    return pl.pallas_call(
        kernel,
        out_shape=(jax.ShapeDtypeStruct((B, N1, D1), data1.dtype),
                   jax.ShapeDtypeStruct((B, N2, D2), data2.dtype)),
        grid_spec=pltpu.PrefetchScalarGridSpec(
            num_scalar_prefetch=0,
            grid=(B // TB,),
            in_specs=in_specs,
            out_specs=out_specs,
        ),
        compiler_params=pltpu.CompilerParams(
            dimension_semantics=("parallel",)),
    )(data1, data2, wq1_t, wq2_t, w1a, w1b, b1, w2a, w2b, b2)


# ------------------------ pure-JAX reference ------------------------
def reference(data1, data2, params, num_attn):
    B, N1, D1 = data1.shape
    _, N2, D2 = data2.shape
    dim = min(D1, D2)
    dk = dim // num_attn

    q1 = jnp.einsum("bnd,ed->bne", data1, params["wq1"])   # [B,N1,dim]
    q2 = jnp.einsum("bnd,ed->bne", data2, params["wq2"])   # [B,N2,dim]
    q1 = q1.reshape(B, N1, num_attn, dk).transpose(0, 2, 1, 3)  # [B,h,N1,dk]
    q2 = q2.reshape(B, N2, num_attn, dk).transpose(0, 2, 1, 3)  # [B,h,N2,dk]

    s1 = jnp.einsum("bhnd,bhmd->bhnm", q2, q1) / math.sqrt(dk)  # [B,h,N2,N1]
    p1 = jax.nn.softmax(s1, axis=-1)
    weighted1 = jnp.einsum("bhnm,bmd->bhnd", p1, data1).mean(axis=1)  # [B,N2,D1]

    s2 = jnp.einsum("bhnd,bhmd->bhnm", q1, q2) / math.sqrt(dk)  # [B,h,N1,N2]
    p2 = jax.nn.softmax(s2, axis=-1)
    weighted2 = jnp.einsum("bhnm,bmd->bhnd", p2, data2).mean(axis=1)  # [B,N1,D2]

    cat1 = jnp.concatenate([data1, weighted2], axis=-1)  # [B,N1,D1+D2]
    cat2 = jnp.concatenate([data2, weighted1], axis=-1)  # [B,N2,D1+D2]

    g1 = jax.nn.sigmoid(jnp.einsum("bnk,dk->bnd", cat1, params["wre1"]) + params["bre1"])
    t1 = jnp.tanh(jnp.einsum("bnk,dk->bnd", cat1, params["wl1"]) + params["bl1"])
    out1 = g1 * data1 + (1.0 - g1) * t1

    g2 = jax.nn.sigmoid(jnp.einsum("bnk,dk->bnd", cat2, params["wre2"]) + params["bre2"])
    t2 = jnp.tanh(jnp.einsum("bnk,dk->bnd", cat2, params["wl2"]) + params["bl2"])
    out2 = g2 * data2 + (1.0 - g2) * t2
    return out1, out2


def init_params(key, dim1, dim2):
    dim = min(dim1, dim2)
    ks = jax.random.split(key, 10)

    def lin(k, fan_out, fan_in):
        bound = 1.0 / math.sqrt(fan_in)
        return jax.random.uniform(k, (fan_out, fan_in), jnp.float32, -bound, bound)

    def bias(k, fan_out, fan_in):
        bound = 1.0 / math.sqrt(fan_in)
        return jax.random.uniform(k, (fan_out,), jnp.float32, -bound, bound)

    return {
        "wq1": lin(ks[0], dim, dim1),
        "wq2": lin(ks[1], dim, dim2),
        "wre1": lin(ks[2], dim1, dim1 + dim2), "bre1": bias(ks[3], dim1, dim1 + dim2),
        "wl1": lin(ks[4], dim1, dim1 + dim2), "bl1": bias(ks[5], dim1, dim1 + dim2),
        "wre2": lin(ks[6], dim2, dim1 + dim2), "bre2": bias(ks[7], dim2, dim1 + dim2),
        "wl2": lin(ks[8], dim2, dim1 + dim2), "bl2": bias(ks[9], dim2, dim1 + dim2),
    }


if __name__ == "__main__":
    B, N1, N2 = 2, 8, 16
    dim1, dim2 = 32, 48
    num_attn = 4

    key = jax.random.PRNGKey(0)
    k1, k2, kp = jax.random.split(key, 3)
    data1 = jax.random.normal(k1, (B, N1, dim1), jnp.float32)
    data2 = jax.random.normal(k2, (B, N2, dim2), jnp.float32)
    params = init_params(kp, dim1, dim2)

    out1, out2 = normal_sublayer1_pallas(data1, data2, params, num_attn)
    out1 = jax.block_until_ready(out1)
    out2 = jax.block_until_ready(out2)

    ref1, ref2 = reference(data1, data2, params, num_attn)
    # 2e-4 tolerance: exact math, only fp reassociation from the head-sum hoist
    # and the split/fused gate matmuls.
    assert jnp.allclose(out1, ref1, atol=2e-4, rtol=2e-4), "out1 mismatch"
    assert jnp.allclose(out2, ref2, atol=2e-4, rtol=2e-4), "out2 mismatch"

    print("KERNEL_OK")
</pallas_src>

<mosaic_0001>
module attributes {stable_mosaic.version = 11 : i64} {
  func.func @kernel(%arg0: i32, %arg1: memref<1x8x32xf32, #tpu.memory_space<vmem>>, %arg2: memref<1x16x48xf32, #tpu.memory_space<vmem>>, %arg3: memref<32x32xf32, #tpu.memory_space<vmem>>, %arg4: memref<48x32xf32, #tpu.memory_space<vmem>>, %arg5: memref<32x64xf32, #tpu.memory_space<vmem>>, %arg6: memref<48x64xf32, #tpu.memory_space<vmem>>, %arg7: memref<1x64xf32, #tpu.memory_space<vmem>>, %arg8: memref<48x96xf32, #tpu.memory_space<vmem>>, %arg9: memref<32x96xf32, #tpu.memory_space<vmem>>, %arg10: memref<1x96xf32, #tpu.memory_space<vmem>>, %arg11: memref<1x8x32xf32, #tpu.memory_space<vmem>>, %arg12: memref<1x16x48xf32, #tpu.memory_space<vmem>>) attributes {dimension_semantics = [#tpu.dimension_semantics<parallel>], iteration_bounds = array<i64: 2>, scalar_prefetch = 0 : i64, scratch_operands = 0 : i64, tpu.core_type = #tpu.core_type<tc>, window_params = [{transform_indices = @transform_0, window_bounds = array<i64: 1, 8, 32>}, {transform_indices = @transform_1, window_bounds = array<i64: 1, 16, 48>}, {pipeline_mode = #tpu.pipeline_mode<synchronous>, transform_indices = @transform_2, window_bounds = array<i64: 32, 32>}, {pipeline_mode = #tpu.pipeline_mode<synchronous>, transform_indices = @transform_3, window_bounds = array<i64: 48, 32>}, {pipeline_mode = #tpu.pipeline_mode<synchronous>, transform_indices = @transform_4, window_bounds = array<i64: 32, 64>}, {pipeline_mode = #tpu.pipeline_mode<synchronous>, transform_indices = @transform_5, window_bounds = array<i64: 48, 64>}, {pipeline_mode = #tpu.pipeline_mode<synchronous>, transform_indices = @transform_6, window_bounds = array<i64: 1, 64>}, {pipeline_mode = #tpu.pipeline_mode<synchronous>, transform_indices = @transform_7, window_bounds = array<i64: 48, 96>}, {pipeline_mode = #tpu.pipeline_mode<synchronous>, transform_indices = @transform_8, window_bounds = array<i64: 32, 96>}, {pipeline_mode = #tpu.pipeline_mode<synchronous>, transform_indices = @transform_9, window_bounds = array<i64: 1, 96>}, {transform_indices = @transform_10, window_bounds = array<i64: 1, 8, 32>}, {transform_indices = @transform_11, window_bounds = array<i64: 1, 16, 48>}]} {
    %c0 = arith.constant 0 : index
    %c0_0 = arith.constant 0 : index
    %c0_1 = arith.constant 0 : index
    %0 = vector.load %arg1[%c0, %c0_0, %c0_1] : memref<1x8x32xf32, #tpu.memory_space<vmem>>, vector<1x8x32xf32>
    %c0_2 = arith.constant 0 : index
    %c0_3 = arith.constant 0 : index
    %c0_4 = arith.constant 0 : index
    %1 = vector.load %arg2[%c0_2, %c0_3, %c0_4] : memref<1x16x48xf32, #tpu.memory_space<vmem>>, vector<1x16x48xf32>
    %2 = vector.shape_cast %0 : vector<1x8x32xf32> to vector<8x32xf32>
    %3 = vector.shape_cast %1 : vector<1x16x48xf32> to vector<16x48xf32>
    %c0_5 = arith.constant 0 : index
    %c0_6 = arith.constant 0 : index
    %4 = vector.load %arg3[%c0_5, %c0_6] : memref<32x32xf32, #tpu.memory_space<vmem>>, vector<32x32xf32>
    %cst = arith.constant dense<0.000000e+00> : vector<8x32xf32>
    %5 = tpu.matmul %2, %4, %cst {dimension_numbers = #tpu.dot_dimension_numbers<[1], [0], [0], [1], [0, 0, 1, 1], [], []>} : vector<8x32xf32>, vector<32x32xf32>, vector<8x32xf32> -> vector<8x32xf32>
    %c0_7 = arith.constant 0 : index
    %c0_8 = arith.constant 0 : index
    %6 = vector.load %arg4[%c0_7, %c0_8] : memref<48x32xf32, #tpu.memory_space<vmem>>, vector<48x32xf32>
    %cst_9 = arith.constant dense<0.000000e+00> : vector<16x32xf32>
    %7 = tpu.matmul %3, %6, %cst_9 {dimension_numbers = #tpu.dot_dimension_numbers<[1], [0], [0], [1], [0, 0, 1, 1], [], []>} : vector<16x48xf32>, vector<48x32xf32>, vector<16x32xf32> -> vector<16x32xf32>
    %8 = vector.shape_cast %5 : vector<8x32xf32> to vector<1x8x32xf32>
    %9 = vector.shape_cast %7 : vector<16x32xf32> to vector<1x16x32xf32>
    %cst_10 = arith.constant 0.000000e+00 : f32
    %10 = vector.broadcast %cst_10 : f32 to vector<1x16x8xf32>
    %cst_11 = arith.constant 0.000000e+00 : f32
    %11 = vector.broadcast %cst_11 : f32 to vector<1x8x16xf32>
    %12 = vector.extract_strided_slice %8 {offsets = [0, 0, 0], sizes = [1, 8, 8], strides = [1, 1, 1]} : vector<1x8x32xf32> to vector<1x8x8xf32>
    %13 = vector.extract_strided_slice %9 {offsets = [0, 0, 0], sizes = [1, 16, 8], strides = [1, 1, 1]} : vector<1x16x32xf32> to vector<1x16x8xf32>
    "tpu.trace_start"() <{level = 10 : i32, message = "bqd,bkd->bqk"}> : () -> ()
    %cst_12 = arith.constant dense<0.000000e+00> : vector<1x16x8xf32>
    %14 = tpu.matmul %13, %12, %cst_12 {dimension_numbers = #tpu.dot_dimension_numbers<[2], [2], [1], [1], [0, 0, 0, 1, 1, 1], [0], [0]>} : vector<1x16x8xf32>, vector<1x8x8xf32>, vector<1x16x8xf32> -> vector<1x16x8xf32>
    "tpu.trace_stop"() : () -> ()
    %cst_13 = arith.constant dense<0xFF800000> : vector<1x16xf32>
    %15 = vector.multi_reduction <maximumf>, %14, %cst_13 [2] : vector<1x16x8xf32> to vector<1x16xf32>
    %16 = vector.shape_cast %15 : vector<1x16xf32> to vector<1x16x1xf32>
    %17 = vector.broadcast %16 : vector<1x16x1xf32> to vector<1x16x8xf32>
    %18 = arith.subf %14, %17 : vector<1x16x8xf32>
    %19 = math.exp %18 : vector<1x16x8xf32>
    %cst_14 = arith.constant dense<0.000000e+00> : vector<1x16xf32>
    %20 = vector.multi_reduction <add>, %19, %cst_14 [2] : vector<1x16x8xf32> to vector<1x16xf32>
    %21 = vector.shape_cast %20 : vector<1x16xf32> to vector<1x16x1xf32>
    %22 = vector.broadcast %21 : vector<1x16x1xf32> to vector<1x16x8xf32>
    %23 = arith.divf %19, %22 : vector<1x16x8xf32>
    %24 = arith.addf %10, %23 : vector<1x16x8xf32>
    "tpu.trace_start"() <{level = 10 : i32, message = "bqd,bkd->bqk"}> : () -> ()
    %cst_15 = arith.constant dense<0.000000e+00> : vector<1x8x16xf32>
    %25 = tpu.matmul %12, %13, %cst_15 {dimension_numbers = #tpu.dot_dimension_numbers<[2], [2], [1], [1], [0, 0, 0, 1, 1, 1], [0], [0]>} : vector<1x8x8xf32>, vector<1x16x8xf32>, vector<1x8x16xf32> -> vector<1x8x16xf32>
    "tpu.trace_stop"() : () -> ()
    %cst_16 = arith.constant dense<0xFF800000> : vector<1x8xf32>
    %26 = vector.multi_reduction <maximumf>, %25, %cst_16 [2] : vector<1x8x16xf32> to vector<1x8xf32>
    %27 = vector.shape_cast %26 : vector<1x8xf32> to vector<1x8x1xf32>
    %28 = vector.broadcast %27 : vector<1x8x1xf32> to vector<1x8x16xf32>
    %29 = arith.subf %25, %28 : vector<1x8x16xf32>
    %30 = math.exp %29 : vector<1x8x16xf32>
    %cst_17 = arith.constant dense<0.000000e+00> : vector<1x8xf32>
    %31 = vector.multi_reduction <add>, %30, %cst_17 [2] : vector<1x8x16xf32> to vector<1x8xf32>
    %32 = vector.shape_cast %31 : vector<1x8xf32> to vector<1x8x1xf32>
    %33 = vector.broadcast %32 : vector<1x8x1xf32> to vector<1x8x16xf32>
    %34 = arith.divf %30, %33 : vector<1x8x16xf32>
    %35 = arith.addf %11, %34 : vector<1x8x16xf32>
    %36 = vector.extract_strided_slice %8 {offsets = [0, 0, 8], sizes = [1, 8, 8], strides = [1, 1, 1]} : vector<1x8x32xf32> to vector<1x8x8xf32>
    %37 = vector.extract_strided_slice %9 {offsets = [0, 0, 8], sizes = [1, 16, 8], strides = [1, 1, 1]} : vector<1x16x32xf32> to vector<1x16x8xf32>
    "tpu.trace_start"() <{level = 10 : i32, message = "bqd,bkd->bqk"}> : () -> ()
    %cst_18 = arith.constant dense<0.000000e+00> : vector<1x16x8xf32>
    %38 = tpu.matmul %37, %36, %cst_18 {dimension_numbers = #tpu.dot_dimension_numbers<[2], [2], [1], [1], [0, 0, 0, 1, 1, 1], [0], [0]>} : vector<1x16x8xf32>, vector<1x8x8xf32>, vector<1x16x8xf32> -> vector<1x16x8xf32>
    "tpu.trace_stop"() : () -> ()
    %cst_19 = arith.constant dense<0xFF800000> : vector<1x16xf32>
    %39 = vector.multi_reduction <maximumf>, %38, %cst_19 [2] : vector<1x16x8xf32> to vector<1x16xf32>
    %40 = vector.shape_cast %39 : vector<1x16xf32> to vector<1x16x1xf32>
    %41 = vector.broadcast %40 : vector<1x16x1xf32> to vector<1x16x8xf32>
    %42 = arith.subf %38, %41 : vector<1x16x8xf32>
    %43 = math.exp %42 : vector<1x16x8xf32>
    %cst_20 = arith.constant dense<0.000000e+00> : vector<1x16xf32>
    %44 = vector.multi_reduction <add>, %43, %cst_20 [2] : vector<1x16x8xf32> to vector<1x16xf32>
    %45 = vector.shape_cast %44 : vector<1x16xf32> to vector<1x16x1xf32>
    %46 = vector.broadcast %45 : vector<1x16x1xf32> to vector<1x16x8xf32>
    %47 = arith.divf %43, %46 : vector<1x16x8xf32>
    %48 = arith.addf %24, %47 : vector<1x16x8xf32>
    "tpu.trace_start"() <{level = 10 : i32, message = "bqd,bkd->bqk"}> : () -> ()
    %cst_21 = arith.constant dense<0.000000e+00> : vector<1x8x16xf32>
    %49 = tpu.matmul %36, %37, %cst_21 {dimension_numbers = #tpu.dot_dimension_numbers<[2], [2], [1], [1], [0, 0, 0, 1, 1, 1], [0], [0]>} : vector<1x8x8xf32>, vector<1x16x8xf32>, vector<1x8x16xf32> -> vector<1x8x16xf32>
    "tpu.trace_stop"() : () -> ()
    %cst_22 = arith.constant dense<0xFF800000> : vector<1x8xf32>
    %50 = vector.multi_reduction <maximumf>, %49, %cst_22 [2] : vector<1x8x16xf32> to vector<1x8xf32>
    %51 = vector.shape_cast %50 : vector<1x8xf32> to vector<1x8x1xf32>
    %52 = vector.broadcast %51 : vector<1x8x1xf32> to vector<1x8x16xf32>
    %53 = arith.subf %49, %52 : vector<1x8x16xf32>
    %54 = math.exp %53 : vector<1x8x16xf32>
    %cst_23 = arith.constant dense<0.000000e+00> : vector<1x8xf32>
    %55 = vector.multi_reduction <add>, %54, %cst_23 [2] : vector<1x8x16xf32> to vector<1x8xf32>
    %56 = vector.shape_cast %55 : vector<1x8xf32> to vector<1x8x1xf32>
    %57 = vector.broadcast %56 : vector<1x8x1xf32> to vector<1x8x16xf32>
    %58 = arith.divf %54, %57 : vector<1x8x16xf32>
    %59 = arith.addf %35, %58 : vector<1x8x16xf32>
    %60 = vector.extract_strided_slice %8 {offsets = [0, 0, 16], sizes = [1, 8, 8], strides = [1, 1, 1]} : vector<1x8x32xf32> to vector<1x8x8xf32>
    %61 = vector.extract_strided_slice %9 {offsets = [0, 0, 16], sizes = [1, 16, 8], strides = [1, 1, 1]} : vector<1x16x32xf32> to vector<1x16x8xf32>
    "tpu.trace_start"() <{level = 10 : i32, message = "bqd,bkd->bqk"}> : () -> ()
    %cst_24 = arith.constant dense<0.000000e+00> : vector<1x16x8xf32>
    %62 = tpu.matmul %61, %60, %cst_24 {dimension_numbers = #tpu.dot_dimension_numbers<[2], [2], [1], [1], [0, 0, 0, 1, 1, 1], [0], [0]>} : vector<1x16x8xf32>, vector<1x8x8xf32>, vector<1x16x8xf32> -> vector<1x16x8xf32>
    "tpu.trace_stop"() : () -> ()
    %cst_25 = arith.constant dense<0xFF800000> : vector<1x16xf32>
    %63 = vector.multi_reduction <maximumf>, %62, %cst_25 [2] : vector<1x16x8xf32> to vector<1x16xf32>
    %64 = vector.shape_cast %63 : vector<1x16xf32> to vector<1x16x1xf32>
    %65 = vector.broadcast %64 : vector<1x16x1xf32> to vector<1x16x8xf32>
    %66 = arith.subf %62, %65 : vector<1x16x8xf32>
    %67 = math.exp %66 : vector<1x16x8xf32>
    %cst_26 = arith.constant dense<0.000000e+00> : vector<1x16xf32>
    %68 = vector.multi_reduction <add>, %67, %cst_26 [2] : vector<1x16x8xf32> to vector<1x16xf32>
    %69 = vector.shape_cast %68 : vector<1x16xf32> to vector<1x16x1xf32>
    %70 = vector.broadcast %69 : vector<1x16x1xf32> to vector<1x16x8xf32>
    %71 = arith.divf %67, %70 : vector<1x16x8xf32>
    %72 = arith.addf %48, %71 : vector<1x16x8xf32>
    "tpu.trace_start"() <{level = 10 : i32, message = "bqd,bkd->bqk"}> : () -> ()
    %cst_27 = arith.constant dense<0.000000e+00> : vector<1x8x16xf32>
    %73 = tpu.matmul %60, %61, %cst_27 {dimension_numbers = #tpu.dot_dimension_numbers<[2], [2], [1], [1], [0, 0, 0, 1, 1, 1], [0], [0]>} : vector<1x8x8xf32>, vector<1x16x8xf32>, vector<1x8x16xf32> -> vector<1x8x16xf32>
    "tpu.trace_stop"() : () -> ()
    %cst_28 = arith.constant dense<0xFF800000> : vector<1x8xf32>
    %74 = vector.multi_reduction <maximumf>, %73, %cst_28 [2] : vector<1x8x16xf32> to vector<1x8xf32>
    %75 = vector.shape_cast %74 : vector<1x8xf32> to vector<1x8x1xf32>
    %76 = vector.broadcast %75 : vector<1x8x1xf32> to vector<1x8x16xf32>
    %77 = arith.subf %73, %76 : vector<1x8x16xf32>
    %78 = math.exp %77 : vector<1x8x16xf32>
    %cst_29 = arith.constant dense<0.000000e+00> : vector<1x8xf32>
    %79 = vector.multi_reduction <add>, %78, %cst_29 [2] : vector<1x8x16xf32> to vector<1x8xf32>
    %80 = vector.shape_cast %79 : vector<1x8xf32> to vector<1x8x1xf32>
    %81 = vector.broadcast %80 : vector<1x8x1xf32> to vector<1x8x16xf32>
    %82 = arith.divf %78, %81 : vector<1x8x16xf32>
    %83 = arith.addf %59, %82 : vector<1x8x16xf32>
    %84 = vector.extract_strided_slice %8 {offsets = [0, 0, 24], sizes = [1, 8, 8], strides = [1, 1, 1]} : vector<1x8x32xf32> to vector<1x8x8xf32>
    %85 = vector.extract_strided_slice %9 {offsets = [0, 0, 24], sizes = [1, 16, 8], strides = [1, 1, 1]} : vector<1x16x32xf32> to vector<1x16x8xf32>
    "tpu.trace_start"() <{level = 10 : i32, message = "bqd,bkd->bqk"}> : () -> ()
    %cst_30 = arith.constant dense<0.000000e+00> : vector<1x16x8xf32>
    %86 = tpu.matmul %85, %84, %cst_30 {dimension_numbers = #tpu.dot_dimension_numbers<[2], [2], [1], [1], [0, 0, 0, 1, 1, 1], [0], [0]>} : vector<1x16x8xf32>, vector<1x8x8xf32>, vector<1x16x8xf32> -> vector<1x16x8xf32>
    "tpu.trace_stop"() : () -> ()
    %cst_31 = arith.constant dense<0xFF800000> : vector<1x16xf32>
    %87 = vector.multi_reduction <maximumf>, %86, %cst_31 [2] : vector<1x16x8xf32> to vector<1x16xf32>
    %88 = vector.shape_cast %87 : vector<1x16xf32> to vector<1x16x1xf32>
    %89 = vector.broadcast %88 : vector<1x16x1xf32> to vector<1x16x8xf32>
    %90 = arith.subf %86, %89 : vector<1x16x8xf32>
    %91 = math.exp %90 : vector<1x16x8xf32>
    %cst_32 = arith.constant dense<0.000000e+00> : vector<1x16xf32>
    %92 = vector.multi_reduction <add>, %91, %cst_32 [2] : vector<1x16x8xf32> to vector<1x16xf32>
    %93 = vector.shape_cast %92 : vector<1x16xf32> to vector<1x16x1xf32>
    %94 = vector.broadcast %93 : vector<1x16x1xf32> to vector<1x16x8xf32>
    %95 = arith.divf %91, %94 : vector<1x16x8xf32>
    %96 = arith.addf %72, %95 : vector<1x16x8xf32>
    "tpu.trace_start"() <{level = 10 : i32, message = "bqd,bkd->bqk"}> : () -> ()
    %cst_33 = arith.constant dense<0.000000e+00> : vector<1x8x16xf32>
    %97 = tpu.matmul %84, %85, %cst_33 {dimension_numbers = #tpu.dot_dimension_numbers<[2], [2], [1], [1], [0, 0, 0, 1, 1, 1], [0], [0]>} : vector<1x8x8xf32>, vector<1x16x8xf32>, vector<1x8x16xf32> -> vector<1x8x16xf32>
    "tpu.trace_stop"() : () -> ()
    %cst_34 = arith.constant dense<0xFF800000> : vector<1x8xf32>
    %98 = vector.multi_reduction <maximumf>, %97, %cst_34 [2] : vector<1x8x16xf32> to vector<1x8xf32>
    %99 = vector.shape_cast %98 : vector<1x8xf32> to vector<1x8x1xf32>
    %100 = vector.broadcast %99 : vector<1x8x1xf32> to vector<1x8x16xf32>
    %101 = arith.subf %97, %100 : vector<1x8x16xf32>
    %102 = math.exp %101 : vector<1x8x16xf32>
    %cst_35 = arith.constant dense<0.000000e+00> : vector<1x8xf32>
    %103 = vector.multi_reduction <add>, %102, %cst_35 [2] : vector<1x8x16xf32> to vector<1x8xf32>
    %104 = vector.shape_cast %103 : vector<1x8xf32> to vector<1x8x1xf32>
    %105 = vector.broadcast %104 : vector<1x8x1xf32> to vector<1x8x16xf32>
    %106 = arith.divf %102, %105 : vector<1x8x16xf32>
    %107 = arith.addf %83, %106 : vector<1x8x16xf32>
    "tpu.trace_start"() <{level = 10 : i32, message = "bqk,bkd->bqd"}> : () -> ()
    %cst_36 = arith.constant dense<0.000000e+00> : vector<1x16x32xf32>
    %108 = tpu.matmul %96, %0, %cst_36 {dimension_numbers = #tpu.dot_dimension_numbers<[2], [1], [1], [2], [0, 0, 0, 1, 1, 2], [0], [0]>} : vector<1x16x8xf32>, vector<1x8x32xf32>, vector<1x16x32xf32> -> vector<1x16x32xf32>
    "tpu.trace_stop"() : () -> ()
    %cst_37 = arith.constant 2.500000e-01 : f32
    %109 = vector.broadcast %cst_37 : f32 to vector<1x16x32xf32>
    %110 = arith.mulf %108, %109 : vector<1x16x32xf32>
    "tpu.trace_start"() <{level = 10 : i32, message = "bqk,bkd->bqd"}> : () -> ()
    %cst_38 = arith.constant dense<0.000000e+00> : vector<1x8x48xf32>
    %111 = tpu.matmul %107, %1, %cst_38 {dimension_numbers = #tpu.dot_dimension_numbers<[2], [1], [1], [2], [0, 0, 0, 1, 1, 2], [0], [0]>} : vector<1x8x16xf32>, vector<1x16x48xf32>, vector<1x8x48xf32> -> vector<1x8x48xf32>
    "tpu.trace_stop"() : () -> ()
    %cst_39 = arith.constant 2.500000e-01 : f32
    %112 = vector.broadcast %cst_39 : f32 to vector<1x8x48xf32>
    %113 = arith.mulf %111, %112 : vector<1x8x48xf32>
    %114 = vector.shape_cast %110 : vector<1x16x32xf32> to vector<16x32xf32>
    %115 = vector.shape_cast %113 : vector<1x8x48xf32> to vector<8x48xf32>
    %c0_40 = arith.constant 0 : index
    %c0_41 = arith.constant 0 : index
    %116 = vector.load %arg5[%c0_40, %c0_41] : memref<32x64xf32, #tpu.memory_space<vmem>>, vector<32x64xf32>
    %cst_42 = arith.constant dense<0.000000e+00> : vector<8x64xf32>
    %117 = tpu.matmul %2, %116, %cst_42 {dimension_numbers = #tpu.dot_dimension_numbers<[1], [0], [0], [1], [0, 0, 1, 1], [], []>} : vector<8x32xf32>, vector<32x64xf32>, vector<8x64xf32> -> vector<8x64xf32>
    %c0_43 = arith.constant 0 : index
    %c0_44 = arith.constant 0 : index
    %118 = vector.load %arg6[%c0_43, %c0_44] : memref<48x64xf32, #tpu.memory_space<vmem>>, vector<48x64xf32>
    %cst_45 = arith.constant dense<0.000000e+00> : vector<8x64xf32>
    %119 = tpu.matmul %115, %118, %cst_45 {dimension_numbers = #tpu.dot_dimension_numbers<[1], [0], [0], [1], [0, 0, 1, 1], [], []>} : vector<8x48xf32>, vector<48x64xf32>, vector<8x64xf32> -> vector<8x64xf32>
    %120 = arith.addf %117, %119 : vector<8x64xf32>
    %c0_46 = arith.constant 0 : index
    %c0_47 = arith.constant 0 : index
    %121 = vector.load %arg7[%c0_46, %c0_47] : memref<1x64xf32, #tpu.memory_space<vmem>>, vector<1x64xf32>
    %122 = vector.broadcast %121 : vector<1x64xf32> to vector<8x64xf32>
    %123 = arith.addf %120, %122 : vector<8x64xf32>
    %124 = vector.extract_strided_slice %123 {offsets = [0, 0], sizes = [8, 32], strides = [1, 1]} : vector<8x64xf32> to vector<8x32xf32>
    %125 = arith.negf %124 : vector<8x32xf32>
    %126 = math.exp %125 : vector<8x32xf32>
    %cst_48 = arith.constant 1.000000e+00 : f32
    %127 = vector.broadcast %cst_48 : f32 to vector<8x32xf32>
    %128 = arith.addf %127, %126 : vector<8x32xf32>
    %129 = arith.divf %127, %128 : vector<8x32xf32>
    %130 = vector.extract_strided_slice %123 {offsets = [0, 32], sizes = [8, 32], strides = [1, 1]} : vector<8x64xf32> to vector<8x32xf32>
    %131 = math.tanh %130 : vector<8x32xf32>
    %132 = arith.mulf %129, %2 : vector<8x32xf32>
    %cst_49 = arith.constant 1.000000e+00 : f32
    %133 = vector.broadcast %cst_49 : f32 to vector<8x32xf32>
    %134 = arith.subf %133, %129 : vector<8x32xf32>
    %135 = arith.mulf %134, %131 : vector<8x32xf32>
    %136 = arith.addf %132, %135 : vector<8x32xf32>
    %137 = vector.shape_cast %136 : vector<8x32xf32> to vector<1x8x32xf32>
    %c0_50 = arith.constant 0 : index
    %c0_51 = arith.constant 0 : index
    %c0_52 = arith.constant 0 : index
    %138 = vector.load %arg11[%c0_50, %c0_51, %c0_52] : memref<1x8x32xf32, #tpu.memory_space<vmem>>, vector<1x8x32xf32>
    tpu.vector_store %arg11[%c0_50, %c0_51, %c0_52], %137 {strides = array<i32>} : memref<1x8x32xf32, #tpu.memory_space<vmem>>, vector<1x8x32xf32>,
    %c0_53 = arith.constant 0 : index
    %c0_54 = arith.constant 0 : index
    %139 = vector.load %arg8[%c0_53, %c0_54] : memref<48x96xf32, #tpu.memory_space<vmem>>, vector<48x96xf32>
    %cst_55 = arith.constant dense<0.000000e+00> : vector<16x96xf32>
    %140 = tpu.matmul %3, %139, %cst_55 {dimension_numbers = #tpu.dot_dimension_numbers<[1], [0], [0], [1], [0, 0, 1, 1], [], []>} : vector<16x48xf32>, vector<48x96xf32>, vector<16x96xf32> -> vector<16x96xf32>
    %c0_56 = arith.constant 0 : index
    %c0_57 = arith.constant 0 : index
    %141 = vector.load %arg9[%c0_56, %c0_57] : memref<32x96xf32, #tpu.memory_space<vmem>>, vector<32x96xf32>
    %cst_58 = arith.constant dense<0.000000e+00> : vector<16x96xf32>
    %142 = tpu.matmul %114, %141, %cst_58 {dimension_numbers = #tpu.dot_dimension_numbers<[1], [0], [0], [1], [0, 0, 1, 1], [], []>} : vector<16x32xf32>, vector<32x96xf32>, vector<16x96xf32> -> vector<16x96xf32>
    %143 = arith.addf %140, %142 : vector<16x96xf32>
    %c0_59 = arith.constant 0 : index
    %c0_60 = arith.constant 0 : index
    %144 = vector.load %arg10[%c0_59, %c0_60] : memref<1x96xf32, #tpu.memory_space<vmem>>, vector<1x96xf32>
    %145 = vector.broadcast %144 : vector<1x96xf32> to vector<16x96xf32>
    %146 = arith.addf %143, %145 : vector<16x96xf32>
    %147 = vector.extract_strided_slice %146 {offsets = [0, 0], sizes = [16, 48], strides = [1, 1]} : vector<16x96xf32> to vector<16x48xf32>
    %148 = arith.negf %147 : vector<16x48xf32>
    %149 = math.exp %148 : vector<16x48xf32>
    %cst_61 = arith.constant 1.000000e+00 : f32
    %150 = vector.broadcast %cst_61 : f32 to vector<16x48xf32>
    %151 = arith.addf %150, %149 : vector<16x48xf32>
    %152 = arith.divf %150, %151 : vector<16x48xf32>
    %153 = vector.extract_strided_slice %146 {offsets = [0, 48], sizes = [16, 48], strides = [1, 1]} : vector<16x96xf32> to vector<16x48xf32>
    %154 = math.tanh %153 : vector<16x48xf32>
    %155 = arith.mulf %152, %3 : vector<16x48xf32>
    %cst_62 = arith.constant 1.000000e+00 : f32
    %156 = vector.broadcast %cst_62 : f32 to vector<16x48xf32>
    %157 = arith.subf %156, %152 : vector<16x48xf32>
    %158 = arith.mulf %157, %154 : vector<16x48xf32>
    %159 = arith.addf %155, %158 : vector<16x48xf32>
    %160 = vector.shape_cast %159 : vector<16x48xf32> to vector<1x16x48xf32>
    %c0_63 = arith.constant 0 : index
    %c0_64 = arith.constant 0 : index
    %c0_65 = arith.constant 0 : index
    %161 = vector.load %arg12[%c0_63, %c0_64, %c0_65] : memref<1x16x48xf32, #tpu.memory_space<vmem>>, vector<1x16x48xf32>
    tpu.vector_store %arg12[%c0_63, %c0_64, %c0_65], %160 {strides = array<i32>} : memref<1x16x48xf32, #tpu.memory_space<vmem>>, vector<1x16x48xf32>,
    return
  }
  func.func @transform_0(%arg0: i32) -> (i32, i32, i32) {
    %c0_i32 = arith.constant 0 : i32
    %c0_i32_0 = arith.constant 0 : i32
    %c0_i32_1 = arith.constant 0 : i32
    return %arg0, %c0_i32, %c0_i32_0 : i32, i32, i32
  }
  func.func @transform_1(%arg0: i32) -> (i32, i32, i32) {
    %c0_i32 = arith.constant 0 : i32
    %c0_i32_0 = arith.constant 0 : i32
    %c0_i32_1 = arith.constant 0 : i32
    return %arg0, %c0_i32, %c0_i32_0 : i32, i32, i32
  }
  func.func @transform_2(%arg0: i32) -> (i32, i32) {
    %c0_i32 = arith.constant 0 : i32
    %c0_i32_0 = arith.constant 0 : i32
    %c0_i32_1 = arith.constant 0 : i32
    return %c0_i32, %c0_i32_0 : i32, i32
  }
  func.func @transform_3(%arg0: i32) -> (i32, i32) {
    %c0_i32 = arith.constant 0 : i32
    %c0_i32_0 = arith.constant 0 : i32
    %c0_i32_1 = arith.constant 0 : i32
    return %c0_i32, %c0_i32_0 : i32, i32
  }
  func.func @transform_4(%arg0: i32) -> (i32, i32) {
    %c0_i32 = arith.constant 0 : i32
    %c0_i32_0 = arith.constant 0 : i32
    %c0_i32_1 = arith.constant 0 : i32
    return %c0_i32, %c0_i32_0 : i32, i32
  }
  func.func @transform_5(%arg0: i32) -> (i32, i32) {
    %c0_i32 = arith.constant 0 : i32
    %c0_i32_0 = arith.constant 0 : i32
    %c0_i32_1 = arith.constant 0 : i32
    return %c0_i32, %c0_i32_0 : i32, i32
  }
  func.func @transform_6(%arg0: i32) -> (i32, i32) {
    %c0_i32 = arith.constant 0 : i32
    %c0_i32_0 = arith.constant 0 : i32
    %c0_i32_1 = arith.constant 0 : i32
    return %c0_i32, %c0_i32_0 : i32, i32
  }
  func.func @transform_7(%arg0: i32) -> (i32, i32) {
    %c0_i32 = arith.constant 0 : i32
    %c0_i32_0 = arith.constant 0 : i32
    %c0_i32_1 = arith.constant 0 : i32
    return %c0_i32, %c0_i32_0 : i32, i32
  }
  func.func @transform_8(%arg0: i32) -> (i32, i32) {
    %c0_i32 = arith.constant 0 : i32
    %c0_i32_0 = arith.constant 0 : i32
    %c0_i32_1 = arith.constant 0 : i32
    return %c0_i32, %c0_i32_0 : i32, i32
  }
  func.func @transform_9(%arg0: i32) -> (i32, i32) {
    %c0_i32 = arith.constant 0 : i32
    %c0_i32_0 = arith.constant 0 : i32
    %c0_i32_1 = arith.constant 0 : i32
    return %c0_i32, %c0_i32_0 : i32, i32
  }
  func.func @transform_10(%arg0: i32) -> (i32, i32, i32) {
    %c0_i32 = arith.constant 0 : i32
    %c0_i32_0 = arith.constant 0 : i32
    %c0_i32_1 = arith.constant 0 : i32
    return %arg0, %c0_i32, %c0_i32_0 : i32, i32, i32
  }
  func.func @transform_11(%arg0: i32) -> (i32, i32, i32) {
    %c0_i32 = arith.constant 0 : i32
    %c0_i32_0 = arith.constant 0 : i32
    %c0_i32_1 = arith.constant 0 : i32
    return %arg0, %c0_i32, %c0_i32_0 : i32, i32, i32
  }
}

</mosaic_0001>

<llo_original>
// kernel: tpu_custom_call.1
$region0: #{tpu_custom_call.1}
  #allocation0 [shape = 'u32[]', space=smem, size = 0x4, offset = 0x4, fixed_abs, tag = 'smem constant byte address 0x4 - core index']
  #allocation1 [shape = 'u32[72,128]{1,0:T(1,128)}', space=vmem, size = 0x9000, scoped, tag = 'internal scratch']
  %s0 = inlined_call_operand.hbm [shape: f32[2,8,32], index: 0, kind: input, shape index: {}]
  %s1 = inlined_call_operand.vmem [shape: f32[2,16,48], index: 1, kind: input, shape index: {}]
  %s2 = inlined_call_operand.hbm [shape: f32[32,32], index: 2, kind: input, shape index: {}]
  %s3 = inlined_call_operand.vmem [shape: f32[48,32], index: 3, kind: input, shape index: {}]
  %s4 = inlined_call_operand.hbm [shape: f32[32,64], index: 4, kind: input, shape index: {}]
  %s5 = inlined_call_operand.vmem [shape: f32[48,64], index: 5, kind: input, shape index: {}]
  %s6 = inlined_call_operand.vmem [shape: f32[1,64], index: 6, kind: input, shape index: {}]
  %s7 = inlined_call_operand.hbm [shape: f32[48,96], index: 7, kind: input, shape index: {}]
  %s8 = inlined_call_operand.hbm [shape: f32[32,96], index: 8, kind: input, shape index: {}]
  %s9 = inlined_call_operand.vmem [shape: f32[1,96], index: 9, kind: input, shape index: {}]
  %s10 = inlined_call_operand.hbm [shape: f32[2,8,32], index: 10, kind: output, shape index: {0}]
  %s11 = inlined_call_operand.hbm [shape: f32[2,16,48], index: 11, kind: output, shape index: {1}]
  %12 = xla_tuple %s10, %s11
  %s13 = sld [smem:[#allocation0]]
  $region101: #{tpu_custom_call.1} parent=0
    _
  %s15 = ssub.s32 1, %s13
  %s16 = scalar_select 0, %s15, %s13
  $region1: #{tpu_custom_call.1} parent=0
    #allocation2 [shape = 'u8[8192]{0}', space=vmem, size = 0x2000, scoped, tag = 'input window, operand 0']
    #allocation3 [shape = 's32[2]{0}', space=sflag, size = 0x8, scoped, tag = 'scoped memory for tpu_custom_call.1']
    #allocation4 [shape = 's32[2]{0}', space=sflag, size = 0x8, scoped, tag = 'scoped memory for tpu_custom_call.1']
    #allocation5 [shape = 'u8[16384]{0}', space=vmem, size = 0x4000, scoped, tag = 'input window, operand 2, single buffered']
    #allocation6 [shape = 's32[1]{0}', space=sflag, size = 0x4, scoped, tag = 'scoped memory for tpu_custom_call.1']
    #allocation7 [shape = 'u8[16384]{0}', space=vmem, size = 0x4000, scoped, tag = 'input window, operand 4, single buffered']
    #allocation8 [shape = 'u8[24576]{0}', space=vmem, size = 0x6000, scoped, tag = 'input window, operand 7, single buffered']
    #allocation9 [shape = 's32[1]{0}', space=sflag, size = 0x4, scoped, tag = 'scoped memory for tpu_custom_call.1']
    #allocation10 [shape = 'u8[16384]{0}', space=vmem, size = 0x4000, scoped, tag = 'input window, operand 8, single buffered']
    #allocation11 [shape = 'u8[8192]{0}', space=vmem, size = 0x2000, scoped, tag = 'output window, operand 0']
    #allocation12 [shape = 'u8[16384]{0}', space=vmem, size = 0x4000, scoped, tag = 'output window, operand 1']
    #allocation13 [shape = 's32[2]{0}', space=sflag, size = 0x8, scoped, tag = 'scoped memory for tpu_custom_call.1']
    %17 = vsyncpa [#allocation3], 0
    %s18 = scalar_lea.sflag [#allocation3], 1
    %19 = vsyncpa %s18, 0
    %20 = vsyncpa [#allocation6], 0
    %21 = vsyncpa [#allocation9], 0
    %22 = vsyncpa [#allocation4], 0
    %s23 = scalar_lea.sflag [#allocation4], 1
    %24 = vsyncpa %s23, 0
    %25 = vsyncpa [#allocation13], 0
    %s26 = scalar_lea.sflag [#allocation13], 1
    %27 = vsyncpa %s26, 0
    loop: start=0, step=1, limit=4
    $region2: #{tpu_custom_call.1} parent=1 // loop_pre_header
      _
    $region3: #{tpu_custom_call.1} parent=1 // loop_header
      %s29 = sphi 0, %s33
      %p30 = scmp.ge.s32.totalorder %s29, 4
      %s39 = sphi 0, %s41
      %s42 = sphi 0, %s39
      %s43 = sphi 0, %s42
      %s59 = sphi 0, %s43
      %s65 = sphi 0, %s67
      %s68 = sphi 0, %s65
      %s69 = sphi 0, %s68
      %s85 = sphi 0, %s69
      %s89 = sphi 0, %s89
      %s91 = sphi 0, %s89
      %s92 = sphi 0, %s91
      %s106 = sphi 0, %s92
      %s110 = sphi 0, %s110
      %s112 = sphi 0, %s110
      %s113 = sphi 0, %s112
      %s127 = sphi 0, %s113
      %s131 = sphi 0, %s131
      %s133 = sphi 0, %s131
      %s134 = sphi 0, %s133
      %s148 = sphi 0, %s134
      %s152 = sphi 0, %s152
      %s154 = sphi 0, %s152
      %s155 = sphi 0, %s154
      %s169 = sphi 0, %s155
      %s173 = sphi 0, %s173
      %s175 = sphi 0, %s173
      %s176 = sphi 0, %s175
      %s190 = sphi 0, %s176
      %s194 = sphi 0, %s194
      %s196 = sphi 0, %s194
      %s197 = sphi 0, %s196
      %s211 = sphi 0, %s197
      %s215 = sphi 0, %s215
      %s217 = sphi 0, %s215
      %s218 = sphi 0, %s217
      %s232 = sphi 0, %s218
      %s236 = sphi 0, %s236
      %s238 = sphi 0, %s236
      %s239 = sphi 0, %s238
      %s253 = sphi 0, %s239
      %s259 = sphi 0, %s261
      %s262 = sphi 0, %s259
      %s263 = sphi 0, %s262
      %s279 = sphi 0, %s263
      %s285 = sphi 0, %s287
      %s288 = sphi 0, %s285
      %s289 = sphi 0, %s288
      %s305 = sphi 0, %s289
    $region4: #{tpu_custom_call.1} parent=1 // loop_header_branch
      %32 = sbr.rel (%p30) target = $region8
    $region5: #{tpu_custom_call.1} parent=1 // loop_body
      %s34 = ssub.s32 %s29, 1
      %s35 = ssub.s32 %s29, 2
      %s36 = sadd.s32 %s29, 1
      %s37 = ssub.s32 %s29, %s36
      %p38 = scmp.eq.s32.totalorder %s37, 0
      %s40 = sadd.s32 %s39, 1
      %s41 = scalar_select %p38, %s39, %s40
      %p44 = pneg %p38
      %p45 = scmp.eq.s32.totalorder %s29, 1
      %p46 = por %p44, %p45
      %p47 = scmp.ne.s32.totalorder %s39, %s42
      %p48 = scmp.eq.s32.totalorder %s29, 0
      %p49 = por %p47, %p48
      %p50 = scmp.ne.s32.totalorder %s39, %s42
      %p51 = scmp.eq.s32.totalorder %s34, 1
      %p52 = por %p50, %p51
      %p53 = scmp.ne.s32.totalorder %s42, %s43
      %p54 = scmp.eq.s32.totalorder %s34, 0
      %p55 = por %p53, %p54
      %p56 = scmp.ne.s32.totalorder %s42, %s43
      %p57 = scmp.eq.s32.totalorder %s35, 1
      %p58 = por %p56, %p57
      %p60 = scmp.ne.s32.totalorder %s43, %s59
      %p61 = scmp.eq.s32.totalorder %s35, 0
      %p62 = por %p60, %p61
      %s63 = ssub.s32 %s29, %s36
      %p64 = scmp.eq.s32.totalorder %s63, 0
      %s66 = sadd.s32 %s65, 1
      %s67 = scalar_select %p64, %s65, %s66
      %p70 = pneg %p64
      %p71 = scmp.eq.s32.totalorder %s29, 1
      %p72 = por %p70, %p71
      %p73 = scmp.ne.s32.totalorder %s65, %s68
      %p74 = scmp.eq.s32.totalorder %s29, 0
      %p75 = por %p73, %p74
      %p76 = scmp.ne.s32.totalorder %s65, %s68
      %p77 = scmp.eq.s32.totalorder %s34, 1
      %p78 = por %p76, %p77
      %p79 = scmp.ne.s32.totalorder %s68, %s69
      %p80 = scmp.eq.s32.totalorder %s34, 0
      %p81 = por %p79, %p80
      %p82 = scmp.ne.s32.totalorder %s68, %s69
      %p83 = scmp.eq.s32.totalorder %s35, 1
      %p84 = por %p82, %p83
      %p86 = scmp.ne.s32.totalorder %s69, %s85
      %p87 = scmp.eq.s32.totalorder %s35, 0
      %p88 = por %p86, %p87
      %s90 = sadd.s32 %s89, 1
      %p93 = scmp.eq.s32.totalorder %s29, 1
      %p94 = scmp.ne.s32.totalorder %s89, %s91
      %p95 = scmp.eq.s32.totalorder %s29, 0
      %p96 = por %p94, %p95
      %p97 = scmp.ne.s32.totalorder %s89, %s91
      %p98 = scmp.eq.s32.totalorder %s34, 1
      %p99 = por %p97, %p98
      %p100 = scmp.ne.s32.totalorder %s91, %s92
      %p101 = scmp.eq.s32.totalorder %s34, 0
      %p102 = por %p100, %p101
      %p103 = scmp.ne.s32.totalorder %s91, %s92
      %p104 = scmp.eq.s32.totalorder %s35, 1
      %p105 = por %p103, %p104
      %p107 = scmp.ne.s32.totalorder %s92, %s106
      %p108 = scmp.eq.s32.totalorder %s35, 0
      %p109 = por %p107, %p108
      %s111 = sadd.s32 %s110, 1
      %p114 = scmp.eq.s32.totalorder %s29, 1
      %p115 = scmp.ne.s32.totalorder %s110, %s112
      %p116 = scmp.eq.s32.totalorder %s29, 0
      %p117 = por %p115, %p116
      %p118 = scmp.ne.s32.totalorder %s110, %s112
      %p119 = scmp.eq.s32.totalorder %s34, 1
      %p120 = por %p118, %p119
      %p121 = scmp.ne.s32.totalorder %s112, %s113
      %p122 = scmp.eq.s32.totalorder %s34, 0
      %p123 = por %p121, %p122
      %p124 = scmp.ne.s32.totalorder %s112, %s113
      %p125 = scmp.eq.s32.totalorder %s35, 1
      %p126 = por %p124, %p125
      %p128 = scmp.ne.s32.totalorder %s113, %s127
      %p129 = scmp.eq.s32.totalorder %s35, 0
      %p130 = por %p128, %p129
      %s132 = sadd.s32 %s131, 1
      %p135 = scmp.eq.s32.totalorder %s29, 1
      %p136 = scmp.ne.s32.totalorder %s131, %s133
      %p137 = scmp.eq.s32.totalorder %s29, 0
      %p138 = por %p136, %p137
      %p139 = scmp.ne.s32.totalorder %s131, %s133
      %p140 = scmp.eq.s32.totalorder %s34, 1
      %p141 = por %p139, %p140
      %p142 = scmp.ne.s32.totalorder %s133, %s134
      %p143 = scmp.eq.s32.totalorder %s34, 0
      %p144 = por %p142, %p143
      %p145 = scmp.ne.s32.totalorder %s133, %s134
      %p146 = scmp.eq.s32.totalorder %s35, 1
      %p147 = por %p145, %p146
      %p149 = scmp.ne.s32.totalorder %s134, %s148
      %p150 = scmp.eq.s32.totalorder %s35, 0
      %p151 = por %p149, %p150
      %s153 = sadd.s32 %s152, 1
      %p156 = scmp.eq.s32.totalorder %s29, 1
      %p157 = scmp.ne.s32.totalorder %s152, %s154
      %p158 = scmp.eq.s32.totalorder %s29, 0
      %p159 = por %p157, %p158
      %p160 = scmp.ne.s32.totalorder %s152, %s154
      %p161 = scmp.eq.s32.totalorder %s34, 1
      %p162 = por %p160, %p161
      %p163 = scmp.ne.s32.totalorder %s154, %s155
      %p164 = scmp.eq.s32.totalorder %s34, 0
      %p165 = por %p163, %p164
      %p166 = scmp.ne.s32.totalorder %s154, %s155
      %p167 = scmp.eq.s32.totalorder %s35, 1
      %p168 = por %p166, %p167
      %p170 = scmp.ne.s32.totalorder %s155, %s169
      %p171 = scmp.eq.s32.totalorder %s35, 0
      %p172 = por %p170, %p171
      %s174 = sadd.s32 %s173, 1
      %p177 = scmp.eq.s32.totalorder %s29, 1
      %p178 = scmp.ne.s32.totalorder %s173, %s175
      %p179 = scmp.eq.s32.totalorder %s29, 0
      %p180 = por %p178, %p179
      %p181 = scmp.ne.s32.totalorder %s173, %s175
      %p182 = scmp.eq.s32.totalorder %s34, 1
      %p183 = por %p181, %p182
      %p184 = scmp.ne.s32.totalorder %s175, %s176
      %p185 = scmp.eq.s32.totalorder %s34, 0
      %p186 = por %p184, %p185
      %p187 = scmp.ne.s32.totalorder %s175, %s176
      %p188 = scmp.eq.s32.totalorder %s35, 1
      %p189 = por %p187, %p188
      %p191 = scmp.ne.s32.totalorder %s176, %s190
      %p192 = scmp.eq.s32.totalorder %s35, 0
      %p193 = por %p191, %p192
      %s195 = sadd.s32 %s194, 1
      %p198 = scmp.eq.s32.totalorder %s29, 1
      %p199 = scmp.ne.s32.totalorder %s194, %s196
      %p200 = scmp.eq.s32.totalorder %s29, 0
      %p201 = por %p199, %p200
      %p202 = scmp.ne.s32.totalorder %s194, %s196
      %p203 = scmp.eq.s32.totalorder %s34, 1
      %p204 = por %p202, %p203
      %p205 = scmp.ne.s32.totalorder %s196, %s197
      %p206 = scmp.eq.s32.totalorder %s34, 0
      %p207 = por %p205, %p206
      %p208 = scmp.ne.s32.totalorder %s196, %s197
      %p209 = scmp.eq.s32.totalorder %s35, 1
      %p210 = por %p208, %p209
      %p212 = scmp.ne.s32.totalorder %s197, %s211
      %p213 = scmp.eq.s32.totalorder %s35, 0
      %p214 = por %p212, %p213
      %s216 = sadd.s32 %s215, 1
      %p219 = scmp.eq.s32.totalorder %s29, 1
      %p220 = scmp.ne.s32.totalorder %s215, %s217
      %p221 = scmp.eq.s32.totalorder %s29, 0
      %p222 = por %p220, %p221
      %p223 = scmp.ne.s32.totalorder %s215, %s217
      %p224 = scmp.eq.s32.totalorder %s34, 1
      %p225 = por %p223, %p224
      %p226 = scmp.ne.s32.totalorder %s217, %s218
      %p227 = scmp.eq.s32.totalorder %s34, 0
      %p228 = por %p226, %p227
      %p229 = scmp.ne.s32.totalorder %s217, %s218
      %p230 = scmp.eq.s32.totalorder %s35, 1
      %p231 = por %p229, %p230
      %p233 = scmp.ne.s32.totalorder %s218, %s232
      %p234 = scmp.eq.s32.totalorder %s35, 0
      %p235 = por %p233, %p234
      %s237 = sadd.s32 %s236, 1
      %p240 = scmp.eq.s32.totalorder %s29, 1
      %p241 = scmp.ne.s32.totalorder %s236, %s238
      %p242 = scmp.eq.s32.totalorder %s29, 0
      %p243 = por %p241, %p242
      %p244 = scmp.ne.s32.totalorder %s236, %s238
      %p245 = scmp.eq.s32.totalorder %s34, 1
      %p246 = por %p244, %p245
      %p247 = scmp.ne.s32.totalorder %s238, %s239
      %p248 = scmp.eq.s32.totalorder %s34, 0
      %p249 = por %p247, %p248
      %p250 = scmp.ne.s32.totalorder %s238, %s239
      %p251 = scmp.eq.s32.totalorder %s35, 1
      %p252 = por %p250, %p251
      %p254 = scmp.ne.s32.totalorder %s239, %s253
      %p255 = scmp.eq.s32.totalorder %s35, 0
      %p256 = por %p254, %p255
      %s257 = ssub.s32 %s29, %s36
      %p258 = scmp.eq.s32.totalorder %s257, 0
      %s260 = sadd.s32 %s259, 1
      %s261 = scalar_select %p258, %s259, %s260
      %p264 = pneg %p258
      %p265 = scmp.eq.s32.totalorder %s29, 1
      %p266 = por %p264, %p265
      %p267 = scmp.ne.s32.totalorder %s259, %s262
      %p268 = scmp.eq.s32.totalorder %s29, 0
      %p269 = por %p267, %p268
      %p270 = scmp.ne.s32.totalorder %s259, %s262
      %p271 = scmp.eq.s32.totalorder %s34, 1
      %p272 = por %p270, %p271
      %p273 = scmp.ne.s32.totalorder %s262, %s263
      %p274 = scmp.eq.s32.totalorder %s34, 0
      %p275 = por %p273, %p274
      %p276 = scmp.ne.s32.totalorder %s262, %s263
      %p277 = scmp.eq.s32.totalorder %s35, 1
      %p278 = por %p276, %p277
      %p280 = scmp.ne.s32.totalorder %s263, %s279
      %p281 = scmp.eq.s32.totalorder %s35, 0
      %p282 = por %p280, %p281
      %s283 = ssub.s32 %s29, %s36
      %p284 = scmp.eq.s32.totalorder %s283, 0
      %s286 = sadd.s32 %s285, 1
      %s287 = scalar_select %p284, %s285, %s286
      %p290 = pneg %p284
      %p291 = scmp.eq.s32.totalorder %s29, 1
      %p292 = por %p290, %p291
      %p293 = scmp.ne.s32.totalorder %s285, %s288
      %p294 = scmp.eq.s32.totalorder %s29, 0
      %p295 = por %p293, %p294
      %p296 = scmp.ne.s32.totalorder %s285, %s288
      %p297 = scmp.eq.s32.totalorder %s34, 1
      %p298 = por %p296, %p297
      %p299 = scmp.ne.s32.totalorder %s288, %s289
      %p300 = scmp.eq.s32.totalorder %s34, 0
      %p301 = por %p299, %p300
      %p302 = scmp.ne.s32.totalorder %s288, %s289
      %p303 = scmp.eq.s32.totalorder %s35, 1
      %p304 = por %p302, %p303
      %p306 = scmp.ne.s32.totalorder %s289, %s305
      %p307 = scmp.eq.s32.totalorder %s35, 0
      %p308 = por %p306, %p307
      %p309 = scmp.le.s32.totalorder 1, %s29
      %p310 = scmp.lt.s32.totalorder %s29, 3
      %p311 = pnand %p309, %p310
      %p312 = pneg %p311
      // Predicated region
      $region9: #{tpu_custom_call.1} parent=5 // pred_check
        _
      $region10: #{tpu_custom_call.1} parent=5 // pred_check_branch
        %314 = sbr.rel (%p311) target = $region12
      $region11: #{tpu_custom_call.1} parent=5 // pred_region
        %s315 = ssub.s32 %s29, 1
        // Predicated region
        $region13: #{tpu_custom_call.1} parent=11 // pred_check
          %p316 = pneg %p102
        $region14: #{tpu_custom_call.1} parent=11 // pred_check_branch
          %318 = sbr.rel (%p316) target = $region16
        $region15: #{tpu_custom_call.1} parent=11 // pred_region
          %320 = vsyncadd [#allocation6], 0
          %s321 = sshll.u32 %s2, 4
          %s322 = int_to_ptr.hbm [resolvable:$true] %s321
          %s323 = sshll.u32 [#allocation5], 4
          %s324 = int_to_ptr.vmem [resolvable:$true] %s323
          %329 = dma.hbm_to_vmem [thread:$0]  %s322, 512, %s324, [#allocation6], 128, 128, 8
        $region16: #{tpu_custom_call.1} parent=11 // pred_fallthru
          _
        // Predicated region
        $region17: #{tpu_custom_call.1} parent=11 // pred_check
          %p330 = pneg %p123
        $region18: #{tpu_custom_call.1} parent=11 // pred_check_branch
          %332 = sbr.rel (%p330) target = $region20
        $region19: #{tpu_custom_call.1} parent=11 // pred_region
          _
        $region20: #{tpu_custom_call.1} parent=11 // pred_fallthru
          _
        // Predicated region
        $region21: #{tpu_custom_call.1} parent=11 // pred_check
          %p333 = pneg %p144
        $region22: #{tpu_custom_call.1} parent=11 // pred_check_branch
          %335 = sbr.rel (%p333) target = $region24
        $region23: #{tpu_custom_call.1} parent=11 // pred_region
          %337 = vsyncadd [#allocation6], 0
          %s338 = sshll.u32 %s4, 4
          %s339 = int_to_ptr.hbm [resolvable:$true] %s338
          %s340 = sshll.u32 [#allocation7], 4
          %s341 = int_to_ptr.vmem [resolvable:$true] %s340
          %346 = dma.hbm_to_vmem [thread:$0]  %s339, 512, %s341, [#allocation6], 128, 128, 8
        $region24: #{tpu_custom_call.1} parent=11 // pred_fallthru
          _
        // Predicated region
        $region25: #{tpu_custom_call.1} parent=11 // pred_check
          %p347 = pneg %p165
        $region26: #{tpu_custom_call.1} parent=11 // pred_check_branch
          %349 = sbr.rel (%p347) target = $region28
        $region27: #{tpu_custom_call.1} parent=11 // pred_region
          _
        $region28: #{tpu_custom_call.1} parent=11 // pred_fallthru
          _
        // Predicated region
        $region29: #{tpu_custom_call.1} parent=11 // pred_check
          %p350 = pneg %p186
        $region30: #{tpu_custom_call.1} parent=11 // pred_check_branch
          %352 = sbr.rel (%p350) target = $region32
        $region31: #{tpu_custom_call.1} parent=11 // pred_region
          _
        $region32: #{tpu_custom_call.1} parent=11 // pred_fallthru
          _
        // Predicated region
        $region33: #{tpu_custom_call.1} parent=11 // pred_check
          %p353 = pneg %p207
        $region34: #{tpu_custom_call.1} parent=11 // pred_check_branch
          %355 = sbr.rel (%p353) target = $region36
        $region35: #{tpu_custom_call.1} parent=11 // pred_region
          %357 = vsyncadd [#allocation9], 0
          %s358 = sshll.u32 %s7, 4
          %s359 = int_to_ptr.hbm [resolvable:$true] %s358
          %s360 = sshll.u32 [#allocation8], 4
          %s361 = int_to_ptr.vmem [resolvable:$true] %s360
          %366 = dma.hbm_to_vmem [thread:$0]  %s359, 768, %s361, [#allocation9], 128, 128, 8
        $region36: #{tpu_custom_call.1} parent=11 // pred_fallthru
          _
        // Predicated region
        $region37: #{tpu_custom_call.1} parent=11 // pred_check
          %p367 = pneg %p228
        $region38: #{tpu_custom_call.1} parent=11 // pred_check_branch
          %369 = sbr.rel (%p367) target = $region40
        $region39: #{tpu_custom_call.1} parent=11 // pred_region
          %371 = vsyncadd [#allocation9], 0
          %s372 = sshll.u32 %s8, 4
          %s373 = int_to_ptr.hbm [resolvable:$true] %s372
          %s374 = sshll.u32 [#allocation10], 4
          %s375 = int_to_ptr.vmem [resolvable:$true] %s374
          %380 = dma.hbm_to_vmem [thread:$0]  %s373, 512, %s375, [#allocation9], 128, 128, 8
        $region40: #{tpu_custom_call.1} parent=11 // pred_fallthru
          _
        // Predicated region
        $region41: #{tpu_custom_call.1} parent=11 // pred_check
          %p381 = pneg %p249
        $region42: #{tpu_custom_call.1} parent=11 // pred_check_branch
          %383 = sbr.rel (%p381) target = $region44
        $region43: #{tpu_custom_call.1} parent=11 // pred_region
          _
        $region44: #{tpu_custom_call.1} parent=11 // pred_fallthru
          _
      $region12: #{tpu_custom_call.1} parent=5 // pred_fallthru
        _
      %p384 = scmp.lt.s32.totalorder %s29, 2
      // Predicated region
      $region45: #{tpu_custom_call.1} parent=5 // pred_check
        %p385 = pneg %p384
      $region46: #{tpu_custom_call.1} parent=5 // pred_check_branch
        %387 = sbr.rel (%p385) target = $region48
      $region47: #{tpu_custom_call.1} parent=5 // pred_region
        // Predicated region
        $region49: #{tpu_custom_call.1} parent=47 // pred_check
          %p388 = pneg %p49
        $region50: #{tpu_custom_call.1} parent=47 // pred_check_branch
          %390 = sbr.rel (%p388) target = $region52
        $region51: #{tpu_custom_call.1} parent=47 // pred_region
          %s391 = sand.u32 %s39, 1
          %s392 = scalar_lea.sflag [#allocation3], %s391
          %s393 = sand.u32 %s39, 1
          %s394 = smul.addr %s393, 8
          %s395 = scalar_lea.vmem [#allocation2], %s394
          %397 = vsyncadd %s392, 0
          %s398 = smul.addr %s29, 8
          %s399 = scalar_lea.hbm %s0, %s398
          %s401 = sshll.u32 %s399, 4
          %s402 = int_to_ptr.hbm [resolvable:$true] %s401
          %s403 = sshll.u32 %s395, 4
          %s404 = int_to_ptr.vmem [resolvable:$true] %s403
          %406 = dma.hbm_to_vmem [thread:$0]  %s402, 128, %s404, %s392
        $region52: #{tpu_custom_call.1} parent=47 // pred_fallthru
          _
        // Predicated region
        $region53: #{tpu_custom_call.1} parent=47 // pred_check
          %p407 = pneg %p75
        $region54: #{tpu_custom_call.1} parent=47 // pred_check_branch
          %409 = sbr.rel (%p407) target = $region56
        $region55: #{tpu_custom_call.1} parent=47 // pred_region
          %p410 = scmp.lt.s32.totalorder %s29, 1
          %s411 = scalar_select %p410, %s29, 1
          %s412 = smul.addr %s411, 2
          %s413 = smul.addr %s412, 8
          %s414 = scalar_lea.vmem %s1, %s413
        $region56: #{tpu_custom_call.1} parent=47 // pred_fallthru
          _
      $region48: #{tpu_custom_call.1} parent=5 // pred_fallthru
        _
      %p415 = scmp.le.s32.totalorder 1, %s29
      %p416 = scmp.lt.s32.totalorder %s29, 3
      %p417 = pnand %p415, %p416
      %p418 = pneg %p417
      // Predicated region
      $region57: #{tpu_custom_call.1} parent=5 // pred_check
        _
      $region58: #{tpu_custom_call.1} parent=5 // pred_check_branch
        %420 = sbr.rel (%p417) target = $region60
      $region59: #{tpu_custom_call.1} parent=5 // pred_region
        %s421 = ssub.s32 %s29, 1
        %s422 = sand.u32 %s42, 1
        %s423 = scalar_lea.sflag [#allocation3], %s422
        %s424 = sand.u32 %s42, 1
        %s425 = smul.addr %s424, 8
        %s426 = scalar_lea.vmem [#allocation2], %s425
        // Predicated region
        $region61: #{tpu_custom_call.1} parent=59 // pred_check
          %p427 = pneg %p55
        $region62: #{tpu_custom_call.1} parent=59 // pred_check_branch
          %429 = sbr.rel (%p427) target = $region64
        $region63: #{tpu_custom_call.1} parent=59 // pred_region
          %431 = dma.done %s423, 128
        $region64: #{tpu_custom_call.1} parent=59 // pred_fallthru
          _
        // Predicated region
        $region65: #{tpu_custom_call.1} parent=59 // pred_check
          %p432 = pneg %p102
        $region66: #{tpu_custom_call.1} parent=59 // pred_check_branch
          %434 = sbr.rel (%p432) target = $region68
        $region67: #{tpu_custom_call.1} parent=59 // pred_region
          %436 = dma.done [#allocation6], 512
        $region68: #{tpu_custom_call.1} parent=59 // pred_fallthru
          _
        // Predicated region
        $region69: #{tpu_custom_call.1} parent=59 // pred_check
          %p437 = pneg %p144
        $region70: #{tpu_custom_call.1} parent=59 // pred_check_branch
          %439 = sbr.rel (%p437) target = $region72
        $region71: #{tpu_custom_call.1} parent=59 // pred_region
          %441 = dma.done [#allocation6], 512
        $region72: #{tpu_custom_call.1} parent=59 // pred_fallthru
          _
        // Predicated region
        $region73: #{tpu_custom_call.1} parent=59 // pred_check
          %p442 = pneg %p207
        $region74: #{tpu_custom_call.1} parent=59 // pred_check_branch
          %444 = sbr.rel (%p442) target = $region76
        $region75: #{tpu_custom_call.1} parent=59 // pred_region
          %446 = dma.done [#allocation9], 768
        $region76: #{tpu_custom_call.1} parent=59 // pred_fallthru
          _
        // Predicated region
        $region77: #{tpu_custom_call.1} parent=59 // pred_check
          %p447 = pneg %p228
        $region78: #{tpu_custom_call.1} parent=59 // pred_check_branch
          %449 = sbr.rel (%p447) target = $region80
        $region79: #{tpu_custom_call.1} parent=59 // pred_region
          %451 = dma.done [#allocation9], 512
        $region80: #{tpu_custom_call.1} parent=59 // pred_fallthru
          _
        %s452 = sand.u32 %s42, 1
        %s453 = scalar_lea.sflag [#allocation3], %s452
        %s454 = sand.u32 %s42, 1
        %s455 = smul.addr %s454, 8
        %s456 = scalar_lea.vmem [#allocation2], %s455
        %p457 = pneg %p55
        %p458 = pneg %p52
        %p459 = scmp.lt.s32.totalorder %s34, 1
        %s460 = scalar_select %p459, %s34, 1
        %s461 = smul.addr %s460, 2
        %s462 = smul.addr %s461, 8
        %s463 = scalar_lea.vmem %s1, %s462
        %p464 = pneg %p81
        %p465 = pneg %p78
        %p466 = pneg %p102
        %p467 = pneg %p99
        %p468 = pneg %p123
        %p469 = pneg %p120
        %p470 = pneg %p144
        %p471 = pneg %p141
        %p472 = pneg %p165
        %p473 = pneg %p162
        %p474 = pneg %p186
        %p475 = pneg %p183
        %p476 = pneg %p207
        %p477 = pneg %p204
        %p478 = pneg %p228
        %p479 = pneg %p225
        %p480 = pneg %p249
        %p481 = pneg %p246
        %p482 = pneg %p275
        %p483 = pneg %p272
        %s484 = sand.u32 %s262, 1
        %s485 = scalar_lea.sflag [#allocation4], %s484
        %s486 = sand.u32 %s262, 1
        %s487 = smul.addr %s486, 8
        %s488 = scalar_lea.vmem [#allocation11], %s487
        %p489 = pneg %p301
        %p490 = pneg %p298
        %s491 = sand.u32 %s288, 1
        %s492 = scalar_lea.sflag [#allocation13], %s491
        %s493 = sand.u32 %s288, 1
        %s494 = smul.addr %s493, 16
        %s495 = scalar_lea.vmem [#allocation12], %s494
        %p496 = scmp.lt.s32.totalorder %s34, 1
        %s497 = scalar_select %p496, %s34, 1
        %s498 = smul.addr %s497, 2
        %s499 = smul.addr %s498, 8
        %s500 = scalar_lea.vmem %s1, %s499
        %v501 = vld [vmem:[%s426] sm:$0xff]
        %v502 = vld [vmem:[%s500] sm:$0xff]
        %v503 = vld [vmem:[%s500 + $0x8] sm:$0xff]
        %v504 = vld [vmem:[#allocation5] sm:$0xff]
        %v505 = vld [vmem:[#allocation5 + $0x8] sm:$0xff]
        %v506 = vld [vmem:[#allocation5 + $0x10] sm:$0xff]
        %v507 = vld [vmem:[#allocation5 + $0x18] sm:$0xff]
        %vm508 = vcmask 261120
        %v510 = vsel %vm508, %v501, 0
        %512 = vmatpush.msra.mxu0 0.0
        %513 = vmatpush.msra.mxu0 0.0
        %514 = vmatpush.msra.mxu0 0.0
        %515 = vmatpush.msra.mxu0 0.0
        %516 = vmatpush.msra.mxu0 0.0
        %517 = vmatpush.msra.mxu0 0.0
        %518 = vmatpush.msra.mxu0 0.0
        %519 = vmatpush.msra.mxu0 0.0
        %520 = vmatpush.msra.mxu0 0.0
        %521 = vmatpush.msra.mxu0 0.0
        %522 = vmatpush.msra.mxu0 0.0
        %523 = vmatpush.msra.mxu0 0.0
        %524 = vmatpush.msra.mxu0 %v507
        %525 = vmatpush.msra.mxu0 %v506
        %526 = vmatpush.msra.mxu0 %v505
        %527 = vmatpush.msra.mxu0 %v504
        %528 = vmatmul.f32.gmra.mxu0 %v510
        %v529 = vpop.f32.mrf.mxu0
        %v530 = vadd.f32 0.0, %v529
        %531 = vdwg.mxu0
        %v532 = vld [vmem:[%s3] sm:$0xff]
        %v533 = vld [vmem:[%s3 + $0x8] sm:$0xff]
        %v534 = vld [vmem:[%s3 + $0x10] sm:$0xff]
        %v535 = vld [vmem:[%s3 + $0x18] sm:$0xff]
        %v536 = vld [vmem:[%s3 + $0x20] sm:$0xff]
        %v537 = vld [vmem:[%s3 + $0x28] sm:$0xff]
        %vm538 = vcmask 392192
        %v540 = vsel %vm538, %v502, 0
        %v543 = vsel %vm538, %v503, 0
        %545 = vmatpush.msra.mxu0 0.0
        %546 = vmatpush.msra.mxu0 0.0
        %547 = vmatpush.msra.mxu0 0.0
        %548 = vmatpush.msra.mxu0 0.0
        %549 = vmatpush.msra.mxu0 0.0
        %550 = vmatpush.msra.mxu0 0.0
        %551 = vmatpush.msra.mxu0 0.0
        %552 = vmatpush.msra.mxu0 0.0
        %553 = vmatpush.msra.mxu0 0.0
        %554 = vmatpush.msra.mxu0 0.0
        %555 = vmatpush.msra.mxu0 %v537
        %556 = vmatpush.msra.mxu0 %v536
        %557 = vmatpush.msra.mxu0 %v535
        %558 = vmatpush.msra.mxu0 %v534
        %559 = vmatpush.msra.mxu0 %v533
        %560 = vmatpush.msra.mxu0 %v532
        %561 = vmatmul.f32.gmra.mxu0 %v540
        %v562 = vpop.f32.mrf.mxu0
        %v563 = vadd.f32 0.0, %v562
        %564 = vmatmul.f32.gmra.mxu0 %v543
        %v565 = vpop.f32.mrf.mxu0
        %v566 = vadd.f32 0.0, %v565
        %567 = vdwg.mxu0
        %vm568 = vcmask 64512
        %v570 = vsel %vm568, %v563, 0
        %v573 = vsel %vm568, %v566, 0
        %v576 = vsel %vm568, %v530, 0
        %578 = vmatpush.xpose.msra.mxu0 0.0
        %579 = vmatpush.xpose.msra.mxu0 0.0
        %580 = vmatpush.xpose.msra.mxu0 0.0
        %581 = vmatpush.xpose.msra.mxu0 0.0
        %582 = vmatpush.xpose.msra.mxu0 0.0
        %583 = vmatpush.xpose.msra.mxu0 0.0
        %584 = vmatpush.xpose.msra.mxu0 0.0
        %585 = vmatpush.xpose.msra.mxu0 0.0
        %586 = vmatpush.xpose.msra.mxu0 0.0
        %587 = vmatpush.xpose.msra.mxu0 0.0
        %588 = vmatpush.xpose.msra.mxu0 0.0
        %589 = vmatpush.xpose.msra.mxu0 0.0
        %590 = vmatpush.xpose.msra.mxu0 0.0
        %591 = vmatpush.xpose.msra.mxu0 0.0
        %592 = vmatpush.xpose.msra.mxu0 0.0
        %593 = vmatpush.xpose.msra.mxu0 %v576
        %594 = vmatmul.f32.gmra.mxu0 %v570
        %v595 = vpop.f32.mrf.mxu0
        %v596 = vadd.f32 0.0, %v595
        %597 = vmatmul.f32.gmra.mxu0 %v573
        %v598 = vpop.f32.mrf.mxu0
        %v599 = vadd.f32 0.0, %v598
        %600 = vdwg.mxu0
        %v601 = vsel %vm568, %v596, -inf
        %602 = vmax.xlane.f32.xlu0 %v601
        %v603 = vpop.xlane.xlu0 %602
        %v604 = vsel %vm568, %v599, -inf
        %605 = vmax.xlane.f32.xlu0 %v604
        %v606 = vpop.xlane.xlu0 %605
        %v607 = vsub.f32 %v596, %v603
        %v608 = vsub.f32 %v599, %v606
        %v609 = vmul.f32 %v607, 1.442695
        %v610 = vpow.pop %v609
        %v611 = vmul.f32 %v608, 1.442695
        %v612 = vpow.pop %v611
        %v613 = vsel %vm568, %v610, 0.0
        %614 = vadd.xlane.f32.xlu0 %v613
        %v615 = vpop.xlane.xlu0 %614
        %v616 = vsel %vm568, %v612, 0.0
        %617 = vadd.xlane.f32.xlu0 %v616
        %v618 = vpop.xlane.xlu0 %617
        %v619 = vrcp.pop %v615
        %v620 = vmul.f32 %v615, %v619
        %v621 = vsub.f32 1.0, %v620
        %v622 = vmul.f32 %v619, %v621
        %v623 = vadd.f32 %v619, %v622
        %vm624 = vweird.f32 %v615
        %vm625 = vweird.f32 %v619
        %vm626 = vmor %vm624, %vm625
        %v627 = vsel %vm626, %v619, %v623
        %v628 = vand.u32 2147483647, %v615
        %vm629 = vcmp.eq.f32.partialorder %v628, 8.507059e+37
        %v630 = vand.u32 %v615, 2147483648
        %v631 = vor.u32 1.1754944e-38, %v630
        %v632 = vsel %vm629, %v631, %v627
        %v633 = vmul.f32 %v610, %v632
        %v634 = vrcp.pop %v618
        %v635 = vmul.f32 %v618, %v634
        %v636 = vsub.f32 1.0, %v635
        %v637 = vmul.f32 %v634, %v636
        %v638 = vadd.f32 %v634, %v637
        %vm639 = vweird.f32 %v618
        %vm640 = vweird.f32 %v634
        %vm641 = vmor %vm639, %vm640
        %v642 = vsel %vm641, %v634, %v638
        %v643 = vand.u32 2147483647, %v618
        %vm644 = vcmp.eq.f32.partialorder %v643, 8.507059e+37
        %v645 = vand.u32 %v618, 2147483648
        %v646 = vor.u32 1.1754944e-38, %v645
        %v647 = vsel %vm644, %v646, %v642
        %v648 = vmul.f32 %v612, %v647
        %v649 = vadd.f32 %v633, 0.0
        %v650 = vadd.f32 %v648, 0.0
        %651 = vmatpush.xpose.msra.mxu0 0.0
        %652 = vmatpush.xpose.msra.mxu0 0.0
        %653 = vmatpush.xpose.msra.mxu0 0.0
        %654 = vmatpush.xpose.msra.mxu0 0.0
        %655 = vmatpush.xpose.msra.mxu0 0.0
        %656 = vmatpush.xpose.msra.mxu0 0.0
        %657 = vmatpush.xpose.msra.mxu0 0.0
        %658 = vmatpush.xpose.msra.mxu0 0.0
        %659 = vmatpush.xpose.msra.mxu0 0.0
        %660 = vmatpush.xpose.msra.mxu0 0.0
        %661 = vmatpush.xpose.msra.mxu0 0.0
        %662 = vmatpush.xpose.msra.mxu0 0.0
        %663 = vmatpush.xpose.msra.mxu0 0.0
        %664 = vmatpush.xpose.msra.mxu0 0.0
        %665 = vmatpush.xpose.msra.mxu0 %v573
        %666 = vmatpush.xpose.msra.mxu0 %v570
        %667 = vmatmul.f32.gmra.mxu0 %v576
        %v668 = vpop.f32.mrf.mxu0
        %v669 = vadd.f32 0.0, %v668
        %670 = vdwg.mxu0
        %vm671 = vcmask 130048
        %v672 = vsel %vm671, %v669, -inf
        %673 = vmax.xlane.f32.xlu0 %v672
        %v674 = vpop.xlane.xlu0 %673
        %v675 = vsub.f32 %v669, %v674
        %v676 = vmul.f32 %v675, 1.442695
        %v677 = vpow.pop %v676
        %v678 = vsel %vm671, %v677, 0.0
        %679 = vadd.xlane.f32.xlu0 %v678
        %v680 = vpop.xlane.xlu0 %679
        %v681 = vrcp.pop %v680
        %v682 = vmul.f32 %v680, %v681
        %v683 = vsub.f32 1.0, %v682
        %v684 = vmul.f32 %v681, %v683
        %v685 = vadd.f32 %v681, %v684
        %vm686 = vweird.f32 %v680
        %vm687 = vweird.f32 %v681
        %vm688 = vmor %vm686, %vm687
        %v689 = vsel %vm688, %v681, %v685
        %v690 = vand.u32 2147483647, %v680
        %vm691 = vcmp.eq.f32.partialorder %v690, 8.507059e+37
        %v692 = vand.u32 %v680, 2147483648
        %v693 = vor.u32 1.1754944e-38, %v692
        %v694 = vsel %vm691, %v693, %v689
        %v695 = vmul.f32 %v677, %v694
        %v696 = vadd.f32 %v695, 0.0
        %697 = vrot.lane.b32.xlu0 %v563, 120
        %v698 = vpop.permute.xlu0 %697
        %699 = vrot.lane.b32.xlu0 %v566, 120
        %v700 = vpop.permute.xlu0 %699
        %701 = vrot.lane.b32.xlu0 %v530, 120
        %v702 = vpop.permute.xlu0 %701
        %v703 = vsel %vm568, %v698, 0
        %v705 = vsel %vm568, %v700, 0
        %v707 = vsel %vm568, %v702, 0
        %709 = vmatpush.xpose.msra.mxu0 0.0
        %710 = vmatpush.xpose.msra.mxu0 0.0
        %711 = vmatpush.xpose.msra.mxu0 0.0
        %712 = vmatpush.xpose.msra.mxu0 0.0
        %713 = vmatpush.xpose.msra.mxu0 0.0
        %714 = vmatpush.xpose.msra.mxu0 0.0
        %715 = vmatpush.xpose.msra.mxu0 0.0
        %716 = vmatpush.xpose.msra.mxu0 0.0
        %717 = vmatpush.xpose.msra.mxu0 0.0
        %718 = vmatpush.xpose.msra.mxu0 0.0
        %719 = vmatpush.xpose.msra.mxu0 0.0
        %720 = vmatpush.xpose.msra.mxu0 0.0
        %721 = vmatpush.xpose.msra.mxu0 0.0
        %722 = vmatpush.xpose.msra.mxu0 0.0
        %723 = vmatpush.xpose.msra.mxu0 0.0
        %724 = vmatpush.xpose.msra.mxu0 %v707
        %725 = vmatmul.f32.gmra.mxu0 %v703
        %v726 = vpop.f32.mrf.mxu0
        %v727 = vadd.f32 0.0, %v726
        %728 = vmatmul.f32.gmra.mxu0 %v705
        %v729 = vpop.f32.mrf.mxu0
        %v730 = vadd.f32 0.0, %v729
        %731 = vdwg.mxu0
        %v732 = vsel %vm568, %v727, -inf
        %733 = vmax.xlane.f32.xlu0 %v732
        %v734 = vpop.xlane.xlu0 %733
        %v735 = vsel %vm568, %v730, -inf
        %736 = vmax.xlane.f32.xlu0 %v735
        %v737 = vpop.xlane.xlu0 %736
        %v738 = vsub.f32 %v727, %v734
        %v739 = vsub.f32 %v730, %v737
        %v740 = vmul.f32 %v738, 1.442695
        %v741 = vpow.pop %v740
        %v742 = vmul.f32 %v739, 1.442695
        %v743 = vpow.pop %v742
        %v744 = vsel %vm568, %v741, 0.0
        %745 = vadd.xlane.f32.xlu0 %v744
        %v746 = vpop.xlane.xlu0 %745
        %v747 = vsel %vm568, %v743, 0.0
        %748 = vadd.xlane.f32.xlu0 %v747
        %v749 = vpop.xlane.xlu0 %748
        %v750 = vrcp.pop %v746
        %v751 = vmul.f32 %v746, %v750
        %v752 = vsub.f32 1.0, %v751
        %v753 = vmul.f32 %v750, %v752
        %v754 = vadd.f32 %v750, %v753
        %vm755 = vweird.f32 %v746
        %vm756 = vweird.f32 %v750
        %vm757 = vmor %vm755, %vm756
        %v758 = vsel %vm757, %v750, %v754
        %v759 = vand.u32 2147483647, %v746
        %vm760 = vcmp.eq.f32.partialorder %v759, 8.507059e+37
        %v761 = vand.u32 %v746, 2147483648
        %v762 = vor.u32 1.1754944e-38, %v761
        %v763 = vsel %vm760, %v762, %v758
        %v764 = vmul.f32 %v741, %v763
        %v765 = vrcp.pop %v749
        %v766 = vmul.f32 %v749, %v765
        %v767 = vsub.f32 1.0, %v766
        %v768 = vmul.f32 %v765, %v767
        %v769 = vadd.f32 %v765, %v768
        %vm770 = vweird.f32 %v749
        %vm771 = vweird.f32 %v765
        %vm772 = vmor %vm770, %vm771
        %v773 = vsel %vm772, %v765, %v769
        %v774 = vand.u32 2147483647, %v749
        %vm775 = vcmp.eq.f32.partialorder %v774, 8.507059e+37
        %v776 = vand.u32 %v749, 2147483648
        %v777 = vor.u32 1.1754944e-38, %v776
        %v778 = vsel %vm775, %v777, %v773
        %v779 = vmul.f32 %v743, %v778
        %v780 = vadd.f32 %v649, %v764
        %v781 = vadd.f32 %v650, %v779
        %782 = vmatpush.xpose.msra.mxu0 0.0
        %783 = vmatpush.xpose.msra.mxu0 0.0
        %784 = vmatpush.xpose.msra.mxu0 0.0
        %785 = vmatpush.xpose.msra.mxu0 0.0
        %786 = vmatpush.xpose.msra.mxu0 0.0
        %787 = vmatpush.xpose.msra.mxu0 0.0
        %788 = vmatpush.xpose.msra.mxu0 0.0
        %789 = vmatpush.xpose.msra.mxu0 0.0
        %790 = vmatpush.xpose.msra.mxu0 0.0
        %791 = vmatpush.xpose.msra.mxu0 0.0
        %792 = vmatpush.xpose.msra.mxu0 0.0
        %793 = vmatpush.xpose.msra.mxu0 0.0
        %794 = vmatpush.xpose.msra.mxu0 0.0
        %795 = vmatpush.xpose.msra.mxu0 0.0
        %796 = vmatpush.xpose.msra.mxu0 %v705
        %797 = vmatpush.xpose.msra.mxu0 %v703
        %798 = vmatmul.f32.gmra.mxu0 %v707
        %v799 = vpop.f32.mrf.mxu0
        %v800 = vadd.f32 0.0, %v799
        %801 = vdwg.mxu0
        %v802 = vsel %vm671, %v800, -inf
        %803 = vmax.xlane.f32.xlu0 %v802
        %v804 = vpop.xlane.xlu0 %803
        %v805 = vsub.f32 %v800, %v804
        %v806 = vmul.f32 %v805, 1.442695
        %v807 = vpow.pop %v806
        %v808 = vsel %vm671, %v807, 0.0
        %809 = vadd.xlane.f32.xlu0 %v808
        %v810 = vpop.xlane.xlu0 %809
        %v811 = vrcp.pop %v810
        %v812 = vmul.f32 %v810, %v811
        %v813 = vsub.f32 1.0, %v812
        %v814 = vmul.f32 %v811, %v813
        %v815 = vadd.f32 %v811, %v814
        %vm816 = vweird.f32 %v810
        %vm817 = vweird.f32 %v811
        %vm818 = vmor %vm816, %vm817
        %v819 = vsel %vm818, %v811, %v815
        %v820 = vand.u32 2147483647, %v810
        %vm821 = vcmp.eq.f32.partialorder %v820, 8.507059e+37
        %v822 = vand.u32 %v810, 2147483648
        %v823 = vor.u32 1.1754944e-38, %v822
        %v824 = vsel %vm821, %v823, %v819
        %v825 = vmul.f32 %v807, %v824
        %v826 = vadd.f32 %v696, %v825
        %827 = vrot.lane.b32.xlu0 %v563, 112
        %v828 = vpop.permute.xlu0 %827
        %829 = vrot.lane.b32.xlu0 %v566, 112
        %v830 = vpop.permute.xlu0 %829
        %831 = vrot.lane.b32.xlu0 %v530, 112
        %v832 = vpop.permute.xlu0 %831
        %v833 = vsel %vm568, %v828, 0
        %v835 = vsel %vm568, %v830, 0
        %v837 = vsel %vm568, %v832, 0
        %839 = vmatpush.xpose.msra.mxu0 0.0
        %840 = vmatpush.xpose.msra.mxu0 0.0
        %841 = vmatpush.xpose.msra.mxu0 0.0
        %842 = vmatpush.xpose.msra.mxu0 0.0
        %843 = vmatpush.xpose.msra.mxu0 0.0
        %844 = vmatpush.xpose.msra.mxu0 0.0
        %845 = vmatpush.xpose.msra.mxu0 0.0
        %846 = vmatpush.xpose.msra.mxu0 0.0
        %847 = vmatpush.xpose.msra.mxu0 0.0
        %848 = vmatpush.xpose.msra.mxu0 0.0
        %849 = vmatpush.xpose.msra.mxu0 0.0
        %850 = vmatpush.xpose.msra.mxu0 0.0
        %851 = vmatpush.xpose.msra.mxu0 0.0
        %852 = vmatpush.xpose.msra.mxu0 0.0
        %853 = vmatpush.xpose.msra.mxu0 0.0
        %854 = vmatpush.xpose.msra.mxu0 %v837
        %855 = vmatmul.f32.gmra.mxu0 %v833
        %v856 = vpop.f32.mrf.mxu0
        %v857 = vadd.f32 0.0, %v856
        %858 = vmatmul.f32.gmra.mxu0 %v835
        %v859 = vpop.f32.mrf.mxu0
        %v860 = vadd.f32 0.0, %v859
        %861 = vdwg.mxu0
        %v862 = vsel %vm568, %v857, -inf
        %863 = vmax.xlane.f32.xlu0 %v862
        %v864 = vpop.xlane.xlu0 %863
        %v865 = vsel %vm568, %v860, -inf
        %866 = vmax.xlane.f32.xlu0 %v865
        %v867 = vpop.xlane.xlu0 %866
        %v868 = vsub.f32 %v857, %v864
        %v869 = vsub.f32 %v860, %v867
        %v870 = vmul.f32 %v868, 1.442695
        %v871 = vpow.pop %v870
        %v872 = vmul.f32 %v869, 1.442695
        %v873 = vpow.pop %v872
        %v874 = vsel %vm568, %v871, 0.0
        %875 = vadd.xlane.f32.xlu0 %v874
        %v876 = vpop.xlane.xlu0 %875
        %v877 = vsel %vm568, %v873, 0.0
        %878 = vadd.xlane.f32.xlu0 %v877
        %v879 = vpop.xlane.xlu0 %878
        %v880 = vrcp.pop %v876
        %v881 = vmul.f32 %v876, %v880
        %v882 = vsub.f32 1.0, %v881
        %v883 = vmul.f32 %v880, %v882
        %v884 = vadd.f32 %v880, %v883
        %vm885 = vweird.f32 %v876
        %vm886 = vweird.f32 %v880
        %vm887 = vmor %vm885, %vm886
        %v888 = vsel %vm887, %v880, %v884
        %v889 = vand.u32 2147483647, %v876
        %vm890 = vcmp.eq.f32.partialorder %v889, 8.507059e+37
        %v891 = vand.u32 %v876, 2147483648
        %v892 = vor.u32 1.1754944e-38, %v891
        %v893 = vsel %vm890, %v892, %v888
        %v894 = vmul.f32 %v871, %v893
        %v895 = vrcp.pop %v879
        %v896 = vmul.f32 %v879, %v895
        %v897 = vsub.f32 1.0, %v896
        %v898 = vmul.f32 %v895, %v897
        %v899 = vadd.f32 %v895, %v898
        %vm900 = vweird.f32 %v879
        %vm901 = vweird.f32 %v895
        %vm902 = vmor %vm900, %vm901
        %v903 = vsel %vm902, %v895, %v899
        %v904 = vand.u32 2147483647, %v879
        %vm905 = vcmp.eq.f32.partialorder %v904, 8.507059e+37
        %v906 = vand.u32 %v879, 2147483648
        %v907 = vor.u32 1.1754944e-38, %v906
        %v908 = vsel %vm905, %v907, %v903
        %v909 = vmul.f32 %v873, %v908
        %v910 = vadd.f32 %v780, %v894
        %v911 = vadd.f32 %v781, %v909
        %912 = vmatpush.xpose.msra.mxu0 0.0
        %913 = vmatpush.xpose.msra.mxu0 0.0
        %914 = vmatpush.xpose.msra.mxu0 0.0
        %915 = vmatpush.xpose.msra.mxu0 0.0
        %916 = vmatpush.xpose.msra.mxu0 0.0
        %917 = vmatpush.xpose.msra.mxu0 0.0
        %918 = vmatpush.xpose.msra.mxu0 0.0
        %919 = vmatpush.xpose.msra.mxu0 0.0
        %920 = vmatpush.xpose.msra.mxu0 0.0
        %921 = vmatpush.xpose.msra.mxu0 0.0
        %922 = vmatpush.xpose.msra.mxu0 0.0
        %923 = vmatpush.xpose.msra.mxu0 0.0
        %924 = vmatpush.xpose.msra.mxu0 0.0
        %925 = vmatpush.xpose.msra.mxu0 0.0
        %926 = vmatpush.xpose.msra.mxu0 %v835
        %927 = vmatpush.xpose.msra.mxu0 %v833
        %928 = vmatmul.f32.gmra.mxu0 %v837
        %v929 = vpop.f32.mrf.mxu0
        %v930 = vadd.f32 0.0, %v929
        %931 = vdwg.mxu0
        %v932 = vsel %vm671, %v930, -inf
        %933 = vmax.xlane.f32.xlu0 %v932
        %v934 = vpop.xlane.xlu0 %933
        %v935 = vsub.f32 %v930, %v934
        %v936 = vmul.f32 %v935, 1.442695
        %v937 = vpow.pop %v936
        %v938 = vsel %vm671, %v937, 0.0
        %939 = vadd.xlane.f32.xlu0 %v938
        %v940 = vpop.xlane.xlu0 %939
        %v941 = vrcp.pop %v940
        %v942 = vmul.f32 %v940, %v941
        %v943 = vsub.f32 1.0, %v942
        %v944 = vmul.f32 %v941, %v943
        %v945 = vadd.f32 %v941, %v944
        %vm946 = vweird.f32 %v940
        %vm947 = vweird.f32 %v941
        %vm948 = vmor %vm946, %vm947
        %v949 = vsel %vm948, %v941, %v945
        %v950 = vand.u32 2147483647, %v940
        %vm951 = vcmp.eq.f32.partialorder %v950, 8.507059e+37
        %v952 = vand.u32 %v940, 2147483648
        %v953 = vor.u32 1.1754944e-38, %v952
        %v954 = vsel %vm951, %v953, %v949
        %v955 = vmul.f32 %v937, %v954
        %v956 = vadd.f32 %v826, %v955
        %957 = vrot.lane.b32.xlu0 %v563, 104
        %v958 = vpop.permute.xlu0 %957
        %959 = vrot.lane.b32.xlu0 %v566, 104
        %v960 = vpop.permute.xlu0 %959
        %961 = vrot.lane.b32.xlu0 %v530, 104
        %v962 = vpop.permute.xlu0 %961
        %v963 = vsel %vm568, %v958, 0
        %v965 = vsel %vm568, %v960, 0
        %v967 = vsel %vm568, %v962, 0
        %969 = vmatpush.xpose.msra.mxu0 0.0
        %970 = vmatpush.xpose.msra.mxu0 0.0
        %971 = vmatpush.xpose.msra.mxu0 0.0
        %972 = vmatpush.xpose.msra.mxu0 0.0
        %973 = vmatpush.xpose.msra.mxu0 0.0
        %974 = vmatpush.xpose.msra.mxu0 0.0
        %975 = vmatpush.xpose.msra.mxu0 0.0
        %976 = vmatpush.xpose.msra.mxu0 0.0
        %977 = vmatpush.xpose.msra.mxu0 0.0
        %978 = vmatpush.xpose.msra.mxu0 0.0
        %979 = vmatpush.xpose.msra.mxu0 0.0
        %980 = vmatpush.xpose.msra.mxu0 0.0
        %981 = vmatpush.xpose.msra.mxu0 0.0
        %982 = vmatpush.xpose.msra.mxu0 0.0
        %983 = vmatpush.xpose.msra.mxu0 0.0
        %984 = vmatpush.xpose.msra.mxu0 %v967
        %985 = vmatmul.f32.gmra.mxu0 %v963
        %v986 = vpop.f32.mrf.mxu0
        %v987 = vadd.f32 0.0, %v986
        %988 = vmatmul.f32.gmra.mxu0 %v965
        %v989 = vpop.f32.mrf.mxu0
        %v990 = vadd.f32 0.0, %v989
        %991 = vdwg.mxu0
        %v992 = vsel %vm568, %v987, -inf
        %993 = vmax.xlane.f32.xlu0 %v992
        %v994 = vpop.xlane.xlu0 %993
        %v995 = vsel %vm568, %v990, -inf
        %996 = vmax.xlane.f32.xlu0 %v995
        %v997 = vpop.xlane.xlu0 %996
        %v998 = vsub.f32 %v987, %v994
        %v999 = vsub.f32 %v990, %v997
        %v1000 = vmul.f32 %v998, 1.442695
        %v1001 = vpow.pop %v1000
        %v1002 = vmul.f32 %v999, 1.442695
        %v1003 = vpow.pop %v1002
        %v1004 = vsel %vm568, %v1001, 0.0
        %1005 = vadd.xlane.f32.xlu0 %v1004
        %v1006 = vpop.xlane.xlu0 %1005
        %v1007 = vsel %vm568, %v1003, 0.0
        %1008 = vadd.xlane.f32.xlu0 %v1007
        %v1009 = vpop.xlane.xlu0 %1008
        %v1010 = vrcp.pop %v1006
        %v1011 = vmul.f32 %v1006, %v1010
        %v1012 = vsub.f32 1.0, %v1011
        %v1013 = vmul.f32 %v1010, %v1012
        %v1014 = vadd.f32 %v1010, %v1013
        %vm1015 = vweird.f32 %v1006
        %vm1016 = vweird.f32 %v1010
        %vm1017 = vmor %vm1015, %vm1016
        %v1018 = vsel %vm1017, %v1010, %v1014
        %v1019 = vand.u32 2147483647, %v1006
        %vm1020 = vcmp.eq.f32.partialorder %v1019, 8.507059e+37
        %v1021 = vand.u32 %v1006, 2147483648
        %v1022 = vor.u32 1.1754944e-38, %v1021
        %v1023 = vsel %vm1020, %v1022, %v1018
        %v1024 = vmul.f32 %v1001, %v1023
        %v1025 = vrcp.pop %v1009
        %v1026 = vmul.f32 %v1009, %v1025
        %v1027 = vsub.f32 1.0, %v1026
        %v1028 = vmul.f32 %v1025, %v1027
        %v1029 = vadd.f32 %v1025, %v1028
        %vm1030 = vweird.f32 %v1009
        %vm1031 = vweird.f32 %v1025
        %vm1032 = vmor %vm1030, %vm1031
        %v1033 = vsel %vm1032, %v1025, %v1029
        %v1034 = vand.u32 2147483647, %v1009
        %vm1035 = vcmp.eq.f32.partialorder %v1034, 8.507059e+37
        %v1036 = vand.u32 %v1009, 2147483648
        %v1037 = vor.u32 1.1754944e-38, %v1036
        %v1038 = vsel %vm1035, %v1037, %v1033
        %v1039 = vmul.f32 %v1003, %v1038
        %v1040 = vadd.f32 %v910, %v1024
        %v1041 = vadd.f32 %v911, %v1039
        %1042 = vmatpush.xpose.msra.mxu0 0.0
        %1043 = vmatpush.xpose.msra.mxu0 0.0
        %1044 = vmatpush.xpose.msra.mxu0 0.0
        %1045 = vmatpush.xpose.msra.mxu0 0.0
        %1046 = vmatpush.xpose.msra.mxu0 0.0
        %1047 = vmatpush.xpose.msra.mxu0 0.0
        %1048 = vmatpush.xpose.msra.mxu0 0.0
        %1049 = vmatpush.xpose.msra.mxu0 0.0
        %1050 = vmatpush.xpose.msra.mxu0 0.0
        %1051 = vmatpush.xpose.msra.mxu0 0.0
        %1052 = vmatpush.xpose.msra.mxu0 0.0
        %1053 = vmatpush.xpose.msra.mxu0 0.0
        %1054 = vmatpush.xpose.msra.mxu0 0.0
        %1055 = vmatpush.xpose.msra.mxu0 0.0
        %1056 = vmatpush.xpose.msra.mxu0 %v965
        %1057 = vmatpush.xpose.msra.mxu0 %v963
        %1058 = vmatmul.f32.gmra.mxu0 %v967
        %v1059 = vpop.f32.mrf.mxu0
        %v1060 = vadd.f32 0.0, %v1059
        %1061 = vdwg.mxu0
        %v1062 = vsel %vm671, %v1060, -inf
        %1063 = vmax.xlane.f32.xlu0 %v1062
        %v1064 = vpop.xlane.xlu0 %1063
        %v1065 = vsub.f32 %v1060, %v1064
        %v1066 = vmul.f32 %v1065, 1.442695
        %v1067 = vpow.pop %v1066
        %v1068 = vsel %vm671, %v1067, 0.0
        %1069 = vadd.xlane.f32.xlu0 %v1068
        %v1070 = vpop.xlane.xlu0 %1069
        %v1071 = vrcp.pop %v1070
        %v1072 = vmul.f32 %v1070, %v1071
        %v1073 = vsub.f32 1.0, %v1072
        %v1074 = vmul.f32 %v1071, %v1073
        %v1075 = vadd.f32 %v1071, %v1074
        %vm1076 = vweird.f32 %v1070
        %vm1077 = vweird.f32 %v1071
        %vm1078 = vmor %vm1076, %vm1077
        %v1079 = vsel %vm1078, %v1071, %v1075
        %v1080 = vand.u32 2147483647, %v1070
        %vm1081 = vcmp.eq.f32.partialorder %v1080, 8.507059e+37
        %v1082 = vand.u32 %v1070, 2147483648
        %v1083 = vor.u32 1.1754944e-38, %v1082
        %v1084 = vsel %vm1081, %v1083, %v1079
        %v1085 = vmul.f32 %v1067, %v1084
        %v1086 = vadd.f32 %v956, %v1085
        %v1088 = vsel %vm568, %v1040, 0
        %v1091 = vsel %vm568, %v1041, 0
        %1093 = vmatpush.msra.mxu0 0.0
        %1094 = vmatpush.msra.mxu0 0.0
        %1095 = vmatpush.msra.mxu0 0.0
        %1096 = vmatpush.msra.mxu0 0.0
        %1097 = vmatpush.msra.mxu0 0.0
        %1098 = vmatpush.msra.mxu0 0.0
        %1099 = vmatpush.msra.mxu0 0.0
        %1100 = vmatpush.msra.mxu0 0.0
        %1101 = vmatpush.msra.mxu0 0.0
        %1102 = vmatpush.msra.mxu0 0.0
        %1103 = vmatpush.msra.mxu0 0.0
        %1104 = vmatpush.msra.mxu0 0.0
        %1105 = vmatpush.msra.mxu0 0.0
        %1106 = vmatpush.msra.mxu0 0.0
        %1107 = vmatpush.msra.mxu0 0.0
        %1108 = vmatpush.msra.mxu0 %v501
        %1109 = vmatmul.f32.gmra.mxu0 %v1088
        %v1110 = vpop.f32.mrf.mxu0
        %v1111 = vadd.f32 0.0, %v1110
        %1112 = vmatmul.f32.gmra.mxu0 %v1091
        %v1113 = vpop.f32.mrf.mxu0
        %v1114 = vadd.f32 0.0, %v1113
        %1115 = vdwg.mxu0
        %v1116 = vmul.f32 %v1111, 0.25
        %v1117 = vmul.f32 %v1114, 0.25
        %v1119 = vsel %vm671, %v1086, 0
        %1121 = vmatpush.msra.mxu0 0.0
        %1122 = vmatpush.msra.mxu0 0.0
        %1123 = vmatpush.msra.mxu0 0.0
        %1124 = vmatpush.msra.mxu0 0.0
        %1125 = vmatpush.msra.mxu0 0.0
        %1126 = vmatpush.msra.mxu0 0.0
        %1127 = vmatpush.msra.mxu0 0.0
        %1128 = vmatpush.msra.mxu0 0.0
        %1129 = vmatpush.msra.mxu0 0.0
        %1130 = vmatpush.msra.mxu0 0.0
        %1131 = vmatpush.msra.mxu0 0.0
        %1132 = vmatpush.msra.mxu0 0.0
        %1133 = vmatpush.msra.mxu0 0.0
        %1134 = vmatpush.msra.mxu0 0.0
        %1135 = vmatpush.msra.mxu0 %v503
        %1136 = vmatpush.msra.mxu0 %v502
        %1137 = vmatmul.f32.gmra.mxu0 %v1119
        %v1138 = vpop.f32.mrf.mxu0
        %v1139 = vadd.f32 0.0, %v1138
        %1140 = vdwg.mxu0
        %v1141 = vmul.f32 %v1139, 0.25
        %v1142 = vld [vmem:[#allocation7] sm:$0xff]
        %v1143 = vld [vmem:[#allocation7 + $0x8] sm:$0xff]
        %v1144 = vld [vmem:[#allocation7 + $0x10] sm:$0xff]
        %v1145 = vld [vmem:[#allocation7 + $0x18] sm:$0xff]
        %v1146 = vld [vmem:[%s5] sm:$0xff]
        %v1147 = vld [vmem:[%s5 + $0x8] sm:$0xff]
        %v1148 = vld [vmem:[%s5 + $0x10] sm:$0xff]
        %v1149 = vld [vmem:[%s5 + $0x18] sm:$0xff]
        %v1150 = vld [vmem:[%s5 + $0x20] sm:$0xff]
        %v1151 = vld [vmem:[%s5 + $0x28] sm:$0xff]
        %v1153 = vsel %vm538, %v1141, 0
        %1155 = vmatpush.msra.mxu0 0.0
        %1156 = vmatpush.msra.mxu0 0.0
        %1157 = vmatpush.msra.mxu0 0.0
        %1158 = vmatpush.msra.mxu0 0.0
        %1159 = vmatpush.msra.mxu0 0.0
        %1160 = vmatpush.msra.mxu0 0.0
        %1161 = vmatpush.msra.mxu0 0.0
        %1162 = vmatpush.msra.mxu0 0.0
        %1163 = vmatpush.msra.mxu0 0.0
        %1164 = vmatpush.msra.mxu0 0.0
        %1165 = vmatpush.msra.mxu0 %v1151
        %1166 = vmatpush.msra.mxu0 %v1150
        %1167 = vmatpush.msra.mxu0 %v1149
        %1168 = vmatpush.msra.mxu0 %v1148
        %1169 = vmatpush.msra.mxu0 %v1147
        %1170 = vmatpush.msra.mxu0 %v1146
        %1171 = vmatmul.f32.gmra.mxu0 %v1153
        %v1172 = vpop.f32.mrf.mxu0
        %v1173 = vadd.f32 0.0, %v1172
        %1174 = vdwg.mxu0
        %1175 = vmatpush.msra.mxu0 0.0
        %1176 = vmatpush.msra.mxu0 0.0
        %1177 = vmatpush.msra.mxu0 0.0
        %1178 = vmatpush.msra.mxu0 0.0
        %1179 = vmatpush.msra.mxu0 0.0
        %1180 = vmatpush.msra.mxu0 0.0
        %1181 = vmatpush.msra.mxu0 0.0
        %1182 = vmatpush.msra.mxu0 0.0
        %1183 = vmatpush.msra.mxu0 0.0
        %1184 = vmatpush.msra.mxu0 0.0
        %1185 = vmatpush.msra.mxu0 0.0
        %1186 = vmatpush.msra.mxu0 0.0
        %1187 = vmatpush.msra.mxu0 %v1145
        %1188 = vmatpush.msra.mxu0 %v1144
        %1189 = vmatpush.msra.mxu0 %v1143
        %1190 = vmatpush.msra.mxu0 %v1142
        %1191 = vmatmul.f32.gmra.mxu0 %v510
        %v1192 = vpop.f32.mrf.mxu0
        %v1193 = vadd.f32 %v1173, %v1192
        %1194 = vdwg.mxu0
        %v1195 = vld [vmem:[%s6] sm:$0x1]
        %v1197 = vperm.slane %v1195, 0
        %v1199 = vadd.f32 %v1193, %v1197
        %v1200 = vxor.u32 %v1199, 2147483648
        %v1201 = vmul.f32 %v1200, 1.442695
        %v1202 = vpow.pop %v1201
        %v1203 = vadd.f32 %v1202, 1.0
        %v1204 = vrcp.pop %v1203
        %v1205 = vmul.f32 %v1203, %v1204
        %v1206 = vsub.f32 1.0, %v1205
        %v1207 = vmul.f32 %v1204, %v1206
        %v1208 = vadd.f32 %v1204, %v1207
        %vm1209 = vweird.f32 %v1203
        %vm1210 = vweird.f32 %v1204
        %vm1211 = vmor %vm1209, %vm1210
        %v1212 = vsel %vm1211, %v1204, %v1208
        %v1213 = vand.u32 2147483647, %v1203
        %vm1214 = vcmp.eq.f32.partialorder %v1213, 8.507059e+37
        %v1215 = vand.u32 %v1203, 2147483648
        %v1216 = vor.u32 1.1754944e-38, %v1215
        %v1217 = vsel %vm1214, %v1216, %v1212
        %v1218 = vmul.f32 1.0, %v1217
        %v1219 = vtanh.pop %v1199
        %v1220 = vmul.f32 %v1218, %v501
        %v1221 = vsub.f32 1.0, %v1218
        %1223 = vrot.lane.b32.xlu0 %v1219, 96
        %v1224 = vpop.permute.xlu0 %1223
        %v1226 = vmul.f32 %v1221, %v1224
        %v1227 = vadd.f32 %v1220, %v1226
        %1228 = vst.msk [vmem:[%s488] sm:$0xff] %vm508, %v1227
        %v1229 = vld [vmem:[#allocation8] sm:$0xff]
        %v1230 = vld [vmem:[#allocation8 + $0x8] sm:$0xff]
        %v1231 = vld [vmem:[#allocation8 + $0x10] sm:$0xff]
        %v1232 = vld [vmem:[#allocation8 + $0x18] sm:$0xff]
        %v1233 = vld [vmem:[#allocation8 + $0x20] sm:$0xff]
        %v1234 = vld [vmem:[#allocation8 + $0x28] sm:$0xff]
        %v1235 = vld [vmem:[#allocation10] sm:$0xff]
        %v1236 = vld [vmem:[#allocation10 + $0x8] sm:$0xff]
        %v1237 = vld [vmem:[#allocation10 + $0x10] sm:$0xff]
        %v1238 = vld [vmem:[#allocation10 + $0x18] sm:$0xff]
        %v1240 = vsel %vm508, %v1116, 0
        %v1243 = vsel %vm508, %v1117, 0
        %1245 = vmatpush.msra.mxu0 0.0
        %1246 = vmatpush.msra.mxu0 0.0
        %1247 = vmatpush.msra.mxu0 0.0
        %1248 = vmatpush.msra.mxu0 0.0
        %1249 = vmatpush.msra.mxu0 0.0
        %1250 = vmatpush.msra.mxu0 0.0
        %1251 = vmatpush.msra.mxu0 0.0
        %1252 = vmatpush.msra.mxu0 0.0
        %1253 = vmatpush.msra.mxu0 0.0
        %1254 = vmatpush.msra.mxu0 0.0
        %1255 = vmatpush.msra.mxu0 0.0
        %1256 = vmatpush.msra.mxu0 0.0
        %1257 = vmatpush.msra.mxu0 %v1238
        %1258 = vmatpush.msra.mxu0 %v1237
        %1259 = vmatpush.msra.mxu0 %v1236
        %1260 = vmatpush.msra.mxu0 %v1235
        %1261 = vmatmul.f32.gmra.mxu0 %v1240
        %v1262 = vpop.f32.mrf.mxu0
        %v1263 = vadd.f32 0.0, %v1262
        %1264 = vmatmul.f32.gmra.mxu0 %v1243
        %v1265 = vpop.f32.mrf.mxu0
        %v1266 = vadd.f32 0.0, %v1265
        %1267 = vdwg.mxu0
        %1268 = vmatpush.msra.mxu0 0.0
        %1269 = vmatpush.msra.mxu0 0.0
        %1270 = vmatpush.msra.mxu0 0.0
        %1271 = vmatpush.msra.mxu0 0.0
        %1272 = vmatpush.msra.mxu0 0.0
        %1273 = vmatpush.msra.mxu0 0.0
        %1274 = vmatpush.msra.mxu0 0.0
        %1275 = vmatpush.msra.mxu0 0.0
        %1276 = vmatpush.msra.mxu0 0.0
        %1277 = vmatpush.msra.mxu0 0.0
        %1278 = vmatpush.msra.mxu0 %v1234
        %1279 = vmatpush.msra.mxu0 %v1233
        %1280 = vmatpush.msra.mxu0 %v1232
        %1281 = vmatpush.msra.mxu0 %v1231
        %1282 = vmatpush.msra.mxu0 %v1230
        %1283 = vmatpush.msra.mxu0 %v1229
        %1284 = vmatmul.f32.gmra.mxu0 %v540
        %v1285 = vpop.f32.mrf.mxu0
        %v1286 = vadd.f32 %v1263, %v1285
        %1287 = vmatmul.f32.gmra.mxu0 %v543
        %v1288 = vpop.f32.mrf.mxu0
        %v1289 = vadd.f32 %v1266, %v1288
        %1290 = vdwg.mxu0
        %v1291 = vld [vmem:[%s9] sm:$0x1]
        %v1293 = vperm.slane %v1291, 0
        %v1295 = vadd.f32 %v1286, %v1293
        %v1296 = vadd.f32 %v1289, %v1293
        %v1297 = vxor.u32 %v1295, 2147483648
        %v1298 = vxor.u32 %v1296, 2147483648
        %v1299 = vmul.f32 %v1297, 1.442695
        %v1300 = vpow.pop %v1299
        %v1301 = vmul.f32 %v1298, 1.442695
        %v1302 = vpow.pop %v1301
        %v1303 = vadd.f32 %v1300, 1.0
        %v1304 = vadd.f32 %v1302, 1.0
        %v1305 = vrcp.pop %v1303
        %v1306 = vmul.f32 %v1303, %v1305
        %v1307 = vsub.f32 1.0, %v1306
        %v1308 = vmul.f32 %v1305, %v1307
        %v1309 = vadd.f32 %v1305, %v1308
        %vm1310 = vweird.f32 %v1303
        %vm1311 = vweird.f32 %v1305
        %vm1312 = vmor %vm1310, %vm1311
        %v1313 = vsel %vm1312, %v1305, %v1309
        %v1314 = vand.u32 2147483647, %v1303
        %vm1315 = vcmp.eq.f32.partialorder %v1314, 8.507059e+37
        %v1316 = vand.u32 %v1303, 2147483648
        %v1317 = vor.u32 1.1754944e-38, %v1316
        %v1318 = vsel %vm1315, %v1317, %v1313
        %v1319 = vmul.f32 1.0, %v1318
        %v1320 = vrcp.pop %v1304
        %v1321 = vmul.f32 %v1304, %v1320
        %v1322 = vsub.f32 1.0, %v1321
        %v1323 = vmul.f32 %v1320, %v1322
        %v1324 = vadd.f32 %v1320, %v1323
        %vm1325 = vweird.f32 %v1304
        %vm1326 = vweird.f32 %v1320
        %vm1327 = vmor %vm1325, %vm1326
        %v1328 = vsel %vm1327, %v1320, %v1324
        %v1329 = vand.u32 2147483647, %v1304
        %vm1330 = vcmp.eq.f32.partialorder %v1329, 8.507059e+37
        %v1331 = vand.u32 %v1304, 2147483648
        %v1332 = vor.u32 1.1754944e-38, %v1331
        %v1333 = vsel %vm1330, %v1332, %v1328
        %v1334 = vmul.f32 1.0, %v1333
        %v1335 = vtanh.pop %v1295
        %v1336 = vtanh.pop %v1296
        %v1337 = vmul.f32 %v1319, %v502
        %v1338 = vmul.f32 %v1334, %v503
        %v1339 = vsub.f32 1.0, %v1319
        %v1340 = vsub.f32 1.0, %v1334
        %1343 = vrot.lane.b32.xlu0 %v1335, 80
        %v1344 = vpop.permute.xlu0 %1343
        %1345 = vrot.lane.b32.xlu0 %v1336, 80
        %v1346 = vpop.permute.xlu0 %1345
        %v1349 = vmul.f32 %v1339, %v1344
        %v1350 = vmul.f32 %v1340, %v1346
        %v1351 = vadd.f32 %v1337, %v1349
        %v1352 = vadd.f32 %v1338, %v1350
        %1353 = vst.msk [vmem:[%s495] sm:$0xff] %vm538, %v1351
        %1354 = vst.msk [vmem:[%s495 + $0x8] sm:$0xff] %vm538, %v1352
        %s1355 = sand.u32 %s262, 1
        %s1356 = scalar_lea.sflag [#allocation4], %s1355
        %s1357 = sand.u32 %s262, 1
        %s1358 = smul.addr %s1357, 8
        %s1359 = scalar_lea.vmem [#allocation11], %s1358
        %s1360 = sand.u32 %s288, 1
        %s1361 = scalar_lea.sflag [#allocation13], %s1360
        %s1362 = sand.u32 %s288, 1
        %s1363 = smul.addr %s1362, 16
        %s1364 = scalar_lea.vmem [#allocation12], %s1363
        // Predicated region
        $region81: #{tpu_custom_call.1} parent=59 // pred_check
          %p1365 = pneg %p272
        $region82: #{tpu_custom_call.1} parent=59 // pred_check_branch
          %1367 = sbr.rel (%p1365) target = $region84
        $region83: #{tpu_custom_call.1} parent=59 // pred_region
          %1369 = vsyncadd %s1356, 0
          %s1370 = smul.addr %s34, 8
          %s1371 = scalar_lea.hbm %s10, %s1370
          %s1373 = sshll.u32 %s1359, 4
          %s1374 = int_to_ptr.vmem [resolvable:$true] %s1373
          %s1375 = sshll.u32 %s1371, 4
          %s1376 = int_to_ptr.hbm [resolvable:$true] %s1375
          %1378 = dma.vmem_to_hbm [thread:$0]  %s1374, 128, %s1376, %s1356
        $region84: #{tpu_custom_call.1} parent=59 // pred_fallthru
          _
        // Predicated region
        $region85: #{tpu_custom_call.1} parent=59 // pred_check
          %p1379 = pneg %p298
        $region86: #{tpu_custom_call.1} parent=59 // pred_check_branch
          %1381 = sbr.rel (%p1379) target = $region88
        $region87: #{tpu_custom_call.1} parent=59 // pred_region
          %1383 = vsyncadd %s1361, 0
          %s1384 = smul.addr %s34, 2
          %s1385 = smul.addr %s1384, 8
          %s1386 = scalar_lea.hbm %s11, %s1385
          %s1387 = sshll.u32 %s1364, 4
          %s1388 = int_to_ptr.vmem [resolvable:$true] %s1387
          %s1389 = sshll.u32 %s1386, 4
          %s1390 = int_to_ptr.hbm [resolvable:$true] %s1389
          %1395 = dma.vmem_to_hbm [thread:$0]  %s1388, 256, %s1390, %s1361, 128, 128, 8
        $region88: #{tpu_custom_call.1} parent=59 // pred_fallthru
          _
      $region60: #{tpu_custom_call.1} parent=5 // pred_fallthru
        _
      %p1396 = scmp.le.s32.totalorder 2, %s29
      // Predicated region
      $region89: #{tpu_custom_call.1} parent=5 // pred_check
        %p1397 = pneg %p1396
      $region90: #{tpu_custom_call.1} parent=5 // pred_check_branch
        %1399 = sbr.rel (%p1397) target = $region92
      $region91: #{tpu_custom_call.1} parent=5 // pred_region
        %s1400 = ssub.s32 %s29, 2
        // Predicated region
        $region93: #{tpu_custom_call.1} parent=91 // pred_check
          %p1401 = pneg %p278
        $region94: #{tpu_custom_call.1} parent=91 // pred_check_branch
          %1403 = sbr.rel (%p1401) target = $region96
        $region95: #{tpu_custom_call.1} parent=91 // pred_region
          %s1404 = sand.u32 %s263, 1
          %s1405 = scalar_lea.sflag [#allocation4], %s1404
          %s1406 = sand.u32 %s263, 1
          %s1407 = smul.addr %s1406, 8
          %s1408 = scalar_lea.vmem [#allocation11], %s1407
          %1410 = dma.done %s1405, 128
        $region96: #{tpu_custom_call.1} parent=91 // pred_fallthru
          _
        // Predicated region
        $region97: #{tpu_custom_call.1} parent=91 // pred_check
          %p1411 = pneg %p304
        $region98: #{tpu_custom_call.1} parent=91 // pred_check_branch
          %1413 = sbr.rel (%p1411) target = $region100
        $region99: #{tpu_custom_call.1} parent=91 // pred_region
          %s1414 = sand.u32 %s289, 1
          %s1415 = scalar_lea.sflag [#allocation13], %s1414
          %s1416 = sand.u32 %s289, 1
          %s1417 = smul.addr %s1416, 16
          %s1418 = scalar_lea.vmem [#allocation12], %s1417
          %1420 = dma.done %s1415, 256
        $region100: #{tpu_custom_call.1} parent=91 // pred_fallthru
          _
      $region92: #{tpu_custom_call.1} parent=5 // pred_fallthru
        _
    $region6: #{tpu_custom_call.1} parent=1 // loop_footer
      %s33 = sadd.s32 1, %s29
    $region7: #{tpu_custom_call.1} parent=1 // loop_footer_branch
      %28 = sbr.rel target = $region3
    $region8: #{tpu_custom_call.1} parent=1 // loop_exit
      _
    %1421 = vsyncpa [#allocation3], 1
    %s1422 = scalar_lea.sflag [#allocation3], 1
    %1423 = vsyncpa %s1422, 1
    %1424 = vsyncpa [#allocation6], 1
    %1425 = vsyncpa [#allocation9], 1
    %1426 = vsyncpa [#allocation4], 1
    %s1427 = scalar_lea.sflag [#allocation4], 1
    %1428 = vsyncpa %s1427, 1
    %1429 = vsyncpa [#allocation13], 1
    %s1430 = scalar_lea.sflag [#allocation13], 1
    %1431 = vsyncpa %s1430, 1

</llo_original>
